<compile_context>
chip_gen: v6e
topology: v6e:2x2x1
jax: 0.10.0
libtpu: 0.0.40
codegen_flags: <defaults>
</compile_context>

<pallas_src>
import jax
import jax.numpy as jnp
from jax import lax
from jax.experimental import pallas as pl
from jax.experimental.pallas import tpu as pltpu
import numpy as np


BATCH_PAD = 8      # one sublane tile
HIDDEN_PAD = 128   # one lane tile per gate


def lstm_kernel(tok_ref, h0_ref, c0_ref, embwx_ref, whs_ref, bs_ref,
                whead_ref, chead_ref,
                y_ref, h_out_ref, c_out_ref,
                gx_scr, h_all_scr):
    sb = tok_ref.shape[0]            # seq * BATCH_PAD
    bp, hp = h0_ref.shape            # (BATCH_PAD, HIDDEN_PAD)
    seq = sb // bp
    vp = embwx_ref.shape[0]          # padded vocab (one-hot lane width)

    # (0)+(1) Fused embedding gather + hoisted input projection for ALL steps:
    #   gx = onehot(tok) @ (EmbTable @ WxS) + bS   -- one lane-dense MXU matmul,
    # written straight to VMEM scratch so the recurrence reads aligned tiles.
    lanes = lax.broadcasted_iota(jnp.int32, (sb, vp), 1)
    onehot = (lanes == tok_ref[...]).astype(jnp.float32)          # (sb, vp)
    gx_scr[...] = (jnp.dot(onehot, embwx_ref[...],
                           preferred_element_type=jnp.float32)
                   + bs_ref[...])                                 # (sb, 4*hp)

    whs = whs_ref[...]               # (hp, 4*hp) kept resident across steps
    h = h0_ref[...]                  # (bp, hp)
    c = c0_ref[...]

    # (2) Fully-unrolled serial recurrence.  Every tile is (8 sublane, 128 lane)
    # aligned: gate slices are whole-vreg selects, stores are unmasked.
    # TODO(synk): if the bundle dump shows Mosaic re-issuing the RHS weight load
    # each step, switch to explicit pltpu.matmul_push_rhs/matmul_acc_lhs to keep
    # whs weight-stationary on the MXU.
    for t in range(seq):
        gxt = gx_scr[pl.ds(t * bp, bp), :]                        # aligned vld
        g = gxt + jnp.dot(h, whs, preferred_element_type=jnp.float32)
        gi = jax.nn.sigmoid(g[:, 0 * hp:1 * hp])
        gf = jax.nn.sigmoid(g[:, 1 * hp:2 * hp])
        go = jax.nn.sigmoid(g[:, 2 * hp:3 * hp])
        gc = jnp.tanh(g[:, 3 * hp:4 * hp])
        c = gf * c + gi * gc
        h = go * jnp.tanh(c)
        h_all_scr[pl.ds(t * bp, bp), :] = h                       # aligned vst

    # (3) Folded scalar head applied once to all accumulated hidden states,
    # emitted lane-dense:  (H @ Whq + bq) @ dw^T + db == H @ (Whq dw^T) + scalar.
    # whead has the folded vector in column 0 (rest zero) -> unmasked full store.
    y_ref[...] = (jnp.dot(h_all_scr[...], whead_ref[...],
                          preferred_element_type=jnp.float32)
                  + chead_ref[0, 0])
    h_out_ref[...] = h
    c_out_ref[...] = c


def prepare_params(emb_table, wx, wh, b, whq, bq, dw, db):
    """One-time restack / fold of the LSTM params (hoisted off the call path).

    Gate order [input, forget, output, cell]; hidden padded to HIDDEN_PAD lanes
    per gate with zeros (pad lanes stay numerically inert in the kernel)."""
    hi = lax.Precision.HIGHEST
    vocab, _ = emb_table.shape
    hidden = wh.shape[-1]
    hp = HIDDEN_PAD
    vp = ((vocab + 127) // 128) * 128

    def pad_lanes(m):                       # (rows, hidden) -> (rows, hp)
        return jnp.pad(m, ((0, 0), (0, hp - hidden)))

    wxs = jnp.concatenate([pad_lanes(wx[k]) for k in range(4)], axis=1)  # (E,4hp)
    whs = jnp.concatenate(
        [jnp.pad(wh[k], ((0, hp - hidden), (0, hp - hidden))) for k in range(4)],
        axis=1)                                                          # (hp,4hp)
    bs = jnp.concatenate([pad_lanes(b[k]) for k in range(4)], axis=1)    # (1,4hp)

    # Fold embedding table into the input projection (one-hot matmul form).
    embwx = jnp.pad(jnp.dot(emb_table, wxs, precision=hi),
                    ((0, vp - vocab), (0, 0)))                           # (vp,4hp)

    # Fold projection + dense head; column 0 carries Whq @ dw^T, rest zero.
    whead = jnp.pad(jnp.dot(whq, dw.T, precision=hi),
                    ((0, hp - hidden), (0, 127)))                        # (hp,128)
    chead = (jnp.dot(bq, dw.T, precision=hi) + db).reshape(1, 1)         # SMEM

    return dict(embwx=embwx, whs=whs, bs=bs, whead=whead, chead=chead,
                hidden=hidden)


def lstm_forward_pallas(tokens, h0, c0, p):
    """tokens: (batch, seq) int32.  Returns (Y:(seq*batch, 1), (H, C))."""
    batch, seq = tokens.shape
    hidden = p["hidden"]
    bp, hp = BATCH_PAD, HIDDEN_PAD

    # Pad batch to one sublane tile and hidden to one lane tile (zero rows/lanes
    # stay inert inside the kernel; pad token 0 rows are discarded afterwards).
    tok_pad = jnp.pad(tokens.T, ((0, 0), (0, bp - batch)))               # (seq,bp)
    tok_pad = tok_pad.reshape(seq * bp, 1).astype(jnp.int32)
    h0p = jnp.pad(h0, ((0, bp - batch), (0, hp - hidden)))
    c0p = jnp.pad(c0, ((0, bp - batch), (0, hp - hidden)))

    vmem = pl.BlockSpec(memory_space=pltpu.MemorySpace.VMEM)
    smem = pl.BlockSpec(memory_space=pltpu.MemorySpace.SMEM)

    y_full, h_pad, c_pad = pl.pallas_call(
        lstm_kernel,
        out_shape=(
            jax.ShapeDtypeStruct((seq * bp, 128), jnp.float32),   # lane-dense y
            jax.ShapeDtypeStruct((bp, hp), jnp.float32),
            jax.ShapeDtypeStruct((bp, hp), jnp.float32),
        ),
        in_specs=[vmem, vmem, vmem, vmem, vmem, vmem, vmem, smem],
        out_specs=(vmem, vmem, vmem),
        scratch_shapes=[
            pltpu.VMEM((seq * bp, 4 * hp), jnp.float32),   # gx for all steps
            pltpu.VMEM((seq * bp, hp), jnp.float32),       # accumulated hidden
        ],
    )(tok_pad, h0p, c0p, p["embwx"], p["whs"], p["bs"], p["whead"], p["chead"])

    # torch.cat(outputs, dim=0) of per-step (batch, 1) tensors == this layout.
    y = y_full.reshape(seq, bp, 128)[:, :batch, 0].reshape(seq * batch, 1)
    return y, (h_pad[:batch, :hidden], c_pad[:batch, :hidden])


def lstm_forward_ref(tokens, emb_table, h0, c0, wx, wh, b, whq, bq, dw, db):
    """Pure-JAX reference mirroring the PyTorch `lstm` + embedding transpose."""
    d = lambda a, bb: jnp.dot(a, bb, precision=lax.Precision.HIGHEST)
    x_emb = jnp.take(emb_table, tokens, axis=0).transpose(1, 0, 2)
    H, C = h0, c0
    outs = []
    for t in range(x_emb.shape[0]):
        X = x_emb[t]
        gi = jax.nn.sigmoid(d(X, wx[0]) + d(H, wh[0]) + b[0])
        gf = jax.nn.sigmoid(d(X, wx[1]) + d(H, wh[1]) + b[1])
        go = jax.nn.sigmoid(d(X, wx[2]) + d(H, wh[2]) + b[2])
        gc = jnp.tanh(d(X, wx[3]) + d(H, wh[3]) + b[3])
        C = gf * C + gi * gc
        H = go * jnp.tanh(C)
        Y = d(d(H, whq) + bq, dw.T) + db[0, 0]
        outs.append(Y)
    return jnp.concatenate(outs, axis=0), (H, C)


if __name__ == "__main__":
    # Small, deterministic config consistent with the module.
    vocab_size = 50
    embed_size = 128     # num_inputs == num_outputs == embed_size
    num_hiddens = 32
    batch = 2
    seq = 8

    key = jax.random.PRNGKey(0)
    keys = jax.random.split(key, 16)

    # Embedding table (nn.Embedding default: N(0, 1)).
    emb_table = jax.random.normal(keys[0], (vocab_size, embed_size), jnp.float32)

    def normal(k, shape):
        return jax.random.normal(k, shape, jnp.float32) * 0.01

    # Gate order: [input, forget, output, cell]
    wx = jnp.stack([normal(keys[1], (embed_size, num_hiddens)),
                    normal(keys[2], (embed_size, num_hiddens)),
                    normal(keys[3], (embed_size, num_hiddens)),
                    normal(keys[4], (embed_size, num_hiddens))])        # (4, E, H)
    wh = jnp.stack([normal(keys[5], (num_hiddens, num_hiddens)),
                    normal(keys[6], (num_hiddens, num_hiddens)),
                    normal(keys[7], (num_hiddens, num_hiddens)),
                    normal(keys[8], (num_hiddens, num_hiddens))])       # (4, H, H)
    b = jnp.zeros((4, 1, num_hiddens), jnp.float32)                     # (4, 1, H)
    whq = normal(keys[9], (num_hiddens, embed_size))                    # (H, E)
    bq = jnp.zeros((1, embed_size), jnp.float32)                        # (1, E)
    dense_w = normal(keys[10], (1, embed_size))                         # (1, E)
    dense_b = jax.random.uniform(keys[11], (1, 1), jnp.float32,
                                 minval=-0.05, maxval=0.05)             # (1, 1)

    # Inputs: token ids (batch, seq), initial state of zeros.
    tokens = jax.random.randint(keys[12], (batch, seq), 0, vocab_size, jnp.int32)
    h0 = jnp.zeros((batch, num_hiddens), jnp.float32)
    c0 = jnp.zeros((batch, num_hiddens), jnp.float32)

    # One-time parameter restack / fold (hoisted off the per-call path).
    params = prepare_params(emb_table, wx, wh, b, whq, bq, dense_w, dense_b)

    y, (h, c) = lstm_forward_pallas(tokens, h0, c0, params)
    jax.block_until_ready((y, h, c))

    y_ref, (h_ref, c_ref) = lstm_forward_ref(tokens, emb_table, h0, c0, wx, wh, b,
                                             whq, bq, dense_w, dense_b)

    assert y.shape == (seq * batch, 1)
    assert h.shape == (batch, num_hiddens) and c.shape == (batch, num_hiddens)
    # Gate fusion / embedding fold / head folding reassociate f32 sums.
    np.testing.assert_allclose(np.asarray(y), np.asarray(y_ref), rtol=1e-4, atol=1e-5)
    np.testing.assert_allclose(np.asarray(h), np.asarray(h_ref), rtol=1e-4, atol=1e-5)
    np.testing.assert_allclose(np.asarray(c), np.asarray(c_ref), rtol=1e-4, atol=1e-5)

    print("KERNEL_OK")
</pallas_src>

<mosaic_0001>
module attributes {stable_mosaic.version = 11 : i64} {
  func.func @lstm_kernel(%arg0: memref<64x1xi32, #tpu.memory_space<vmem>>, %arg1: memref<8x128xf32, #tpu.memory_space<vmem>>, %arg2: memref<8x128xf32, #tpu.memory_space<vmem>>, %arg3: memref<128x512xf32, #tpu.memory_space<vmem>>, %arg4: memref<128x512xf32, #tpu.memory_space<vmem>>, %arg5: memref<1x512xf32, #tpu.memory_space<vmem>>, %arg6: memref<128x128xf32, #tpu.memory_space<vmem>>, %arg7: memref<1x1xf32, #tpu.memory_space<smem>>, %arg8: memref<64x128xf32, #tpu.memory_space<vmem>>, %arg9: memref<8x128xf32, #tpu.memory_space<vmem>>, %arg10: memref<8x128xf32, #tpu.memory_space<vmem>>, %arg11: memref<64x512xf32, #tpu.memory_space<vmem>>, %arg12: memref<64x128xf32, #tpu.memory_space<vmem>>) attributes {dimension_semantics = [], scalar_prefetch = 0 : i64, scratch_operands = 2 : i64, tpu.core_type = #tpu.core_type<tc>} {
    %0 = tpu.iota {dimensions = array<i32: 1>} : vector<64x128xi32>
    %c0 = arith.constant 0 : index
    %c0_0 = arith.constant 0 : index
    %1 = vector.load %arg0[%c0, %c0_0] : memref<64x1xi32, #tpu.memory_space<vmem>>, vector<64x1xi32>
    %2 = vector.broadcast %1 : vector<64x1xi32> to vector<64x128xi32>
    %3 = arith.cmpi eq, %0, %2 : vector<64x128xi32>
    %4 = arith.extui %3 : vector<64x128xi1> to vector<64x128xi32>
    %5 = arith.sitofp %4 : vector<64x128xi32> to vector<64x128xf32>
    %c0_1 = arith.constant 0 : index
    %c0_2 = arith.constant 0 : index
    %6 = vector.load %arg3[%c0_1, %c0_2] : memref<128x512xf32, #tpu.memory_space<vmem>>, vector<128x512xf32>
    %cst = arith.constant dense<0.000000e+00> : vector<64x512xf32>
    %7 = tpu.matmul %5, %6, %cst {dimension_numbers = #tpu.dot_dimension_numbers<[1], [0], [0], [1], [0, 0, 1, 1], [], []>} : vector<64x128xf32>, vector<128x512xf32>, vector<64x512xf32> -> vector<64x512xf32>
    %c0_3 = arith.constant 0 : index
    %c0_4 = arith.constant 0 : index
    %8 = vector.load %arg5[%c0_3, %c0_4] : memref<1x512xf32, #tpu.memory_space<vmem>>, vector<1x512xf32>
    %9 = vector.broadcast %8 : vector<1x512xf32> to vector<64x512xf32>
    %10 = arith.addf %7, %9 : vector<64x512xf32>
    %c0_5 = arith.constant 0 : index
    %c0_6 = arith.constant 0 : index
    %11 = vector.load %arg11[%c0_5, %c0_6] : memref<64x512xf32, #tpu.memory_space<vmem>>, vector<64x512xf32>
    tpu.vector_store %arg11[%c0_5, %c0_6], %10 {strides = array<i32>} : memref<64x512xf32, #tpu.memory_space<vmem>>, vector<64x512xf32>,
    %c0_7 = arith.constant 0 : index
    %c0_8 = arith.constant 0 : index
    %12 = vector.load %arg4[%c0_7, %c0_8] : memref<128x512xf32, #tpu.memory_space<vmem>>, vector<128x512xf32>
    %c0_9 = arith.constant 0 : index
    %c0_10 = arith.constant 0 : index
    %13 = vector.load %arg1[%c0_9, %c0_10] : memref<8x128xf32, #tpu.memory_space<vmem>>, vector<8x128xf32>
    %c0_11 = arith.constant 0 : index
    %c0_12 = arith.constant 0 : index
    %14 = vector.load %arg2[%c0_11, %c0_12] : memref<8x128xf32, #tpu.memory_space<vmem>>, vector<8x128xf32>
    %c0_13 = arith.constant 0 : index
    %c0_14 = arith.constant 0 : index
    %15 = vector.load %arg11[%c0_13, %c0_14] : memref<64x512xf32, #tpu.memory_space<vmem>>, vector<8x512xf32>
    %cst_15 = arith.constant dense<0.000000e+00> : vector<8x512xf32>
    %16 = tpu.matmul %13, %12, %cst_15 {dimension_numbers = #tpu.dot_dimension_numbers<[1], [0], [0], [1], [0, 0, 1, 1], [], []>} : vector<8x128xf32>, vector<128x512xf32>, vector<8x512xf32> -> vector<8x512xf32>
    %17 = arith.addf %15, %16 : vector<8x512xf32>
    %18 = vector.extract_strided_slice %17 {offsets = [0, 0], sizes = [8, 128], strides = [1, 1]} : vector<8x512xf32> to vector<8x128xf32>
    %19 = arith.negf %18 : vector<8x128xf32>
    %20 = math.exp %19 : vector<8x128xf32>
    %cst_16 = arith.constant 1.000000e+00 : f32
    %21 = vector.broadcast %cst_16 : f32 to vector<8x128xf32>
    %22 = arith.addf %21, %20 : vector<8x128xf32>
    %23 = arith.divf %21, %22 : vector<8x128xf32>
    %24 = vector.extract_strided_slice %17 {offsets = [0, 128], sizes = [8, 128], strides = [1, 1]} : vector<8x512xf32> to vector<8x128xf32>
    %25 = arith.negf %24 : vector<8x128xf32>
    %26 = math.exp %25 : vector<8x128xf32>
    %cst_17 = arith.constant 1.000000e+00 : f32
    %27 = vector.broadcast %cst_17 : f32 to vector<8x128xf32>
    %28 = arith.addf %27, %26 : vector<8x128xf32>
    %29 = arith.divf %27, %28 : vector<8x128xf32>
    %30 = vector.extract_strided_slice %17 {offsets = [0, 256], sizes = [8, 128], strides = [1, 1]} : vector<8x512xf32> to vector<8x128xf32>
    %31 = arith.negf %30 : vector<8x128xf32>
    %32 = math.exp %31 : vector<8x128xf32>
    %cst_18 = arith.constant 1.000000e+00 : f32
    %33 = vector.broadcast %cst_18 : f32 to vector<8x128xf32>
    %34 = arith.addf %33, %32 : vector<8x128xf32>
    %35 = arith.divf %33, %34 : vector<8x128xf32>
    %36 = vector.extract_strided_slice %17 {offsets = [0, 384], sizes = [8, 128], strides = [1, 1]} : vector<8x512xf32> to vector<8x128xf32>
    %37 = math.tanh %36 : vector<8x128xf32>
    %38 = arith.mulf %29, %14 : vector<8x128xf32>
    %39 = arith.mulf %23, %37 : vector<8x128xf32>
    %40 = arith.addf %38, %39 : vector<8x128xf32>
    %41 = math.tanh %40 : vector<8x128xf32>
    %42 = arith.mulf %35, %41 : vector<8x128xf32>
    %c0_19 = arith.constant 0 : index
    %c0_20 = arith.constant 0 : index
    %43 = vector.load %arg12[%c0_19, %c0_20] : memref<64x128xf32, #tpu.memory_space<vmem>>, vector<8x128xf32>
    tpu.vector_store %arg12[%c0_19, %c0_20], %42 {strides = array<i32>} : memref<64x128xf32, #tpu.memory_space<vmem>>, vector<8x128xf32>,
    %c8 = arith.constant 8 : index
    %c0_21 = arith.constant 0 : index
    %44 = vector.load %arg11[%c8, %c0_21] : memref<64x512xf32, #tpu.memory_space<vmem>>, vector<8x512xf32>
    %cst_22 = arith.constant dense<0.000000e+00> : vector<8x512xf32>
    %45 = tpu.matmul %42, %12, %cst_22 {dimension_numbers = #tpu.dot_dimension_numbers<[1], [0], [0], [1], [0, 0, 1, 1], [], []>} : vector<8x128xf32>, vector<128x512xf32>, vector<8x512xf32> -> vector<8x512xf32>
    %46 = arith.addf %44, %45 : vector<8x512xf32>
    %47 = vector.extract_strided_slice %46 {offsets = [0, 0], sizes = [8, 128], strides = [1, 1]} : vector<8x512xf32> to vector<8x128xf32>
    %48 = arith.negf %47 : vector<8x128xf32>
    %49 = math.exp %48 : vector<8x128xf32>
    %cst_23 = arith.constant 1.000000e+00 : f32
    %50 = vector.broadcast %cst_23 : f32 to vector<8x128xf32>
    %51 = arith.addf %50, %49 : vector<8x128xf32>
    %52 = arith.divf %50, %51 : vector<8x128xf32>
    %53 = vector.extract_strided_slice %46 {offsets = [0, 128], sizes = [8, 128], strides = [1, 1]} : vector<8x512xf32> to vector<8x128xf32>
    %54 = arith.negf %53 : vector<8x128xf32>
    %55 = math.exp %54 : vector<8x128xf32>
    %cst_24 = arith.constant 1.000000e+00 : f32
    %56 = vector.broadcast %cst_24 : f32 to vector<8x128xf32>
    %57 = arith.addf %56, %55 : vector<8x128xf32>
    %58 = arith.divf %56, %57 : vector<8x128xf32>
    %59 = vector.extract_strided_slice %46 {offsets = [0, 256], sizes = [8, 128], strides = [1, 1]} : vector<8x512xf32> to vector<8x128xf32>
    %60 = arith.negf %59 : vector<8x128xf32>
    %61 = math.exp %60 : vector<8x128xf32>
    %cst_25 = arith.constant 1.000000e+00 : f32
    %62 = vector.broadcast %cst_25 : f32 to vector<8x128xf32>
    %63 = arith.addf %62, %61 : vector<8x128xf32>
    %64 = arith.divf %62, %63 : vector<8x128xf32>
    %65 = vector.extract_strided_slice %46 {offsets = [0, 384], sizes = [8, 128], strides = [1, 1]} : vector<8x512xf32> to vector<8x128xf32>
    %66 = math.tanh %65 : vector<8x128xf32>
    %67 = arith.mulf %58, %40 : vector<8x128xf32>
    %68 = arith.mulf %52, %66 : vector<8x128xf32>
    %69 = arith.addf %67, %68 : vector<8x128xf32>
    %70 = math.tanh %69 : vector<8x128xf32>
    %71 = arith.mulf %64, %70 : vector<8x128xf32>
    %c8_26 = arith.constant 8 : index
    %c0_27 = arith.constant 0 : index
    %72 = vector.load %arg12[%c8_26, %c0_27] : memref<64x128xf32, #tpu.memory_space<vmem>>, vector<8x128xf32>
    tpu.vector_store %arg12[%c8_26, %c0_27], %71 {strides = array<i32>} : memref<64x128xf32, #tpu.memory_space<vmem>>, vector<8x128xf32>,
    %c16 = arith.constant 16 : index
    %c0_28 = arith.constant 0 : index
    %73 = vector.load %arg11[%c16, %c0_28] : memref<64x512xf32, #tpu.memory_space<vmem>>, vector<8x512xf32>
    %cst_29 = arith.constant dense<0.000000e+00> : vector<8x512xf32>
    %74 = tpu.matmul %71, %12, %cst_29 {dimension_numbers = #tpu.dot_dimension_numbers<[1], [0], [0], [1], [0, 0, 1, 1], [], []>} : vector<8x128xf32>, vector<128x512xf32>, vector<8x512xf32> -> vector<8x512xf32>
    %75 = arith.addf %73, %74 : vector<8x512xf32>
    %76 = vector.extract_strided_slice %75 {offsets = [0, 0], sizes = [8, 128], strides = [1, 1]} : vector<8x512xf32> to vector<8x128xf32>
    %77 = arith.negf %76 : vector<8x128xf32>
    %78 = math.exp %77 : vector<8x128xf32>
    %cst_30 = arith.constant 1.000000e+00 : f32
    %79 = vector.broadcast %cst_30 : f32 to vector<8x128xf32>
    %80 = arith.addf %79, %78 : vector<8x128xf32>
    %81 = arith.divf %79, %80 : vector<8x128xf32>
    %82 = vector.extract_strided_slice %75 {offsets = [0, 128], sizes = [8, 128], strides = [1, 1]} : vector<8x512xf32> to vector<8x128xf32>
    %83 = arith.negf %82 : vector<8x128xf32>
    %84 = math.exp %83 : vector<8x128xf32>
    %cst_31 = arith.constant 1.000000e+00 : f32
    %85 = vector.broadcast %cst_31 : f32 to vector<8x128xf32>
    %86 = arith.addf %85, %84 : vector<8x128xf32>
    %87 = arith.divf %85, %86 : vector<8x128xf32>
    %88 = vector.extract_strided_slice %75 {offsets = [0, 256], sizes = [8, 128], strides = [1, 1]} : vector<8x512xf32> to vector<8x128xf32>
    %89 = arith.negf %88 : vector<8x128xf32>
    %90 = math.exp %89 : vector<8x128xf32>
    %cst_32 = arith.constant 1.000000e+00 : f32
    %91 = vector.broadcast %cst_32 : f32 to vector<8x128xf32>
    %92 = arith.addf %91, %90 : vector<8x128xf32>
    %93 = arith.divf %91, %92 : vector<8x128xf32>
    %94 = vector.extract_strided_slice %75 {offsets = [0, 384], sizes = [8, 128], strides = [1, 1]} : vector<8x512xf32> to vector<8x128xf32>
    %95 = math.tanh %94 : vector<8x128xf32>
    %96 = arith.mulf %87, %69 : vector<8x128xf32>
    %97 = arith.mulf %81, %95 : vector<8x128xf32>
    %98 = arith.addf %96, %97 : vector<8x128xf32>
    %99 = math.tanh %98 : vector<8x128xf32>
    %100 = arith.mulf %93, %99 : vector<8x128xf32>
    %c16_33 = arith.constant 16 : index
    %c0_34 = arith.constant 0 : index
    %101 = vector.load %arg12[%c16_33, %c0_34] : memref<64x128xf32, #tpu.memory_space<vmem>>, vector<8x128xf32>
    tpu.vector_store %arg12[%c16_33, %c0_34], %100 {strides = array<i32>} : memref<64x128xf32, #tpu.memory_space<vmem>>, vector<8x128xf32>,
    %c24 = arith.constant 24 : index
    %c0_35 = arith.constant 0 : index
    %102 = vector.load %arg11[%c24, %c0_35] : memref<64x512xf32, #tpu.memory_space<vmem>>, vector<8x512xf32>
    %cst_36 = arith.constant dense<0.000000e+00> : vector<8x512xf32>
    %103 = tpu.matmul %100, %12, %cst_36 {dimension_numbers = #tpu.dot_dimension_numbers<[1], [0], [0], [1], [0, 0, 1, 1], [], []>} : vector<8x128xf32>, vector<128x512xf32>, vector<8x512xf32> -> vector<8x512xf32>
    %104 = arith.addf %102, %103 : vector<8x512xf32>
    %105 = vector.extract_strided_slice %104 {offsets = [0, 0], sizes = [8, 128], strides = [1, 1]} : vector<8x512xf32> to vector<8x128xf32>
    %106 = arith.negf %105 : vector<8x128xf32>
    %107 = math.exp %106 : vector<8x128xf32>
    %cst_37 = arith.constant 1.000000e+00 : f32
    %108 = vector.broadcast %cst_37 : f32 to vector<8x128xf32>
    %109 = arith.addf %108, %107 : vector<8x128xf32>
    %110 = arith.divf %108, %109 : vector<8x128xf32>
    %111 = vector.extract_strided_slice %104 {offsets = [0, 128], sizes = [8, 128], strides = [1, 1]} : vector<8x512xf32> to vector<8x128xf32>
    %112 = arith.negf %111 : vector<8x128xf32>
    %113 = math.exp %112 : vector<8x128xf32>
    %cst_38 = arith.constant 1.000000e+00 : f32
    %114 = vector.broadcast %cst_38 : f32 to vector<8x128xf32>
    %115 = arith.addf %114, %113 : vector<8x128xf32>
    %116 = arith.divf %114, %115 : vector<8x128xf32>
    %117 = vector.extract_strided_slice %104 {offsets = [0, 256], sizes = [8, 128], strides = [1, 1]} : vector<8x512xf32> to vector<8x128xf32>
    %118 = arith.negf %117 : vector<8x128xf32>
    %119 = math.exp %118 : vector<8x128xf32>
    %cst_39 = arith.constant 1.000000e+00 : f32
    %120 = vector.broadcast %cst_39 : f32 to vector<8x128xf32>
    %121 = arith.addf %120, %119 : vector<8x128xf32>
    %122 = arith.divf %120, %121 : vector<8x128xf32>
    %123 = vector.extract_strided_slice %104 {offsets = [0, 384], sizes = [8, 128], strides = [1, 1]} : vector<8x512xf32> to vector<8x128xf32>
    %124 = math.tanh %123 : vector<8x128xf32>
    %125 = arith.mulf %116, %98 : vector<8x128xf32>
    %126 = arith.mulf %110, %124 : vector<8x128xf32>
    %127 = arith.addf %125, %126 : vector<8x128xf32>
    %128 = math.tanh %127 : vector<8x128xf32>
    %129 = arith.mulf %122, %128 : vector<8x128xf32>
    %c24_40 = arith.constant 24 : index
    %c0_41 = arith.constant 0 : index
    %130 = vector.load %arg12[%c24_40, %c0_41] : memref<64x128xf32, #tpu.memory_space<vmem>>, vector<8x128xf32>
    tpu.vector_store %arg12[%c24_40, %c0_41], %129 {strides = array<i32>} : memref<64x128xf32, #tpu.memory_space<vmem>>, vector<8x128xf32>,
    %c32 = arith.constant 32 : index
    %c0_42 = arith.constant 0 : index
    %131 = vector.load %arg11[%c32, %c0_42] : memref<64x512xf32, #tpu.memory_space<vmem>>, vector<8x512xf32>
    %cst_43 = arith.constant dense<0.000000e+00> : vector<8x512xf32>
    %132 = tpu.matmul %129, %12, %cst_43 {dimension_numbers = #tpu.dot_dimension_numbers<[1], [0], [0], [1], [0, 0, 1, 1], [], []>} : vector<8x128xf32>, vector<128x512xf32>, vector<8x512xf32> -> vector<8x512xf32>
    %133 = arith.addf %131, %132 : vector<8x512xf32>
    %134 = vector.extract_strided_slice %133 {offsets = [0, 0], sizes = [8, 128], strides = [1, 1]} : vector<8x512xf32> to vector<8x128xf32>
    %135 = arith.negf %134 : vector<8x128xf32>
    %136 = math.exp %135 : vector<8x128xf32>
    %cst_44 = arith.constant 1.000000e+00 : f32
    %137 = vector.broadcast %cst_44 : f32 to vector<8x128xf32>
    %138 = arith.addf %137, %136 : vector<8x128xf32>
    %139 = arith.divf %137, %138 : vector<8x128xf32>
    %140 = vector.extract_strided_slice %133 {offsets = [0, 128], sizes = [8, 128], strides = [1, 1]} : vector<8x512xf32> to vector<8x128xf32>
    %141 = arith.negf %140 : vector<8x128xf32>
    %142 = math.exp %141 : vector<8x128xf32>
    %cst_45 = arith.constant 1.000000e+00 : f32
    %143 = vector.broadcast %cst_45 : f32 to vector<8x128xf32>
    %144 = arith.addf %143, %142 : vector<8x128xf32>
    %145 = arith.divf %143, %144 : vector<8x128xf32>
    %146 = vector.extract_strided_slice %133 {offsets = [0, 256], sizes = [8, 128], strides = [1, 1]} : vector<8x512xf32> to vector<8x128xf32>
    %147 = arith.negf %146 : vector<8x128xf32>
    %148 = math.exp %147 : vector<8x128xf32>
    %cst_46 = arith.constant 1.000000e+00 : f32
    %149 = vector.broadcast %cst_46 : f32 to vector<8x128xf32>
    %150 = arith.addf %149, %148 : vector<8x128xf32>
    %151 = arith.divf %149, %150 : vector<8x128xf32>
    %152 = vector.extract_strided_slice %133 {offsets = [0, 384], sizes = [8, 128], strides = [1, 1]} : vector<8x512xf32> to vector<8x128xf32>
    %153 = math.tanh %152 : vector<8x128xf32>
    %154 = arith.mulf %145, %127 : vector<8x128xf32>
    %155 = arith.mulf %139, %153 : vector<8x128xf32>
    %156 = arith.addf %154, %155 : vector<8x128xf32>
    %157 = math.tanh %156 : vector<8x128xf32>
    %158 = arith.mulf %151, %157 : vector<8x128xf32>
    %c32_47 = arith.constant 32 : index
    %c0_48 = arith.constant 0 : index
    %159 = vector.load %arg12[%c32_47, %c0_48] : memref<64x128xf32, #tpu.memory_space<vmem>>, vector<8x128xf32>
    tpu.vector_store %arg12[%c32_47, %c0_48], %158 {strides = array<i32>} : memref<64x128xf32, #tpu.memory_space<vmem>>, vector<8x128xf32>,
    %c40 = arith.constant 40 : index
    %c0_49 = arith.constant 0 : index
    %160 = vector.load %arg11[%c40, %c0_49] : memref<64x512xf32, #tpu.memory_space<vmem>>, vector<8x512xf32>
    %cst_50 = arith.constant dense<0.000000e+00> : vector<8x512xf32>
    %161 = tpu.matmul %158, %12, %cst_50 {dimension_numbers = #tpu.dot_dimension_numbers<[1], [0], [0], [1], [0, 0, 1, 1], [], []>} : vector<8x128xf32>, vector<128x512xf32>, vector<8x512xf32> -> vector<8x512xf32>
    %162 = arith.addf %160, %161 : vector<8x512xf32>
    %163 = vector.extract_strided_slice %162 {offsets = [0, 0], sizes = [8, 128], strides = [1, 1]} : vector<8x512xf32> to vector<8x128xf32>
    %164 = arith.negf %163 : vector<8x128xf32>
    %165 = math.exp %164 : vector<8x128xf32>
    %cst_51 = arith.constant 1.000000e+00 : f32
    %166 = vector.broadcast %cst_51 : f32 to vector<8x128xf32>
    %167 = arith.addf %166, %165 : vector<8x128xf32>
    %168 = arith.divf %166, %167 : vector<8x128xf32>
    %169 = vector.extract_strided_slice %162 {offsets = [0, 128], sizes = [8, 128], strides = [1, 1]} : vector<8x512xf32> to vector<8x128xf32>
    %170 = arith.negf %169 : vector<8x128xf32>
    %171 = math.exp %170 : vector<8x128xf32>
    %cst_52 = arith.constant 1.000000e+00 : f32
    %172 = vector.broadcast %cst_52 : f32 to vector<8x128xf32>
    %173 = arith.addf %172, %171 : vector<8x128xf32>
    %174 = arith.divf %172, %173 : vector<8x128xf32>
    %175 = vector.extract_strided_slice %162 {offsets = [0, 256], sizes = [8, 128], strides = [1, 1]} : vector<8x512xf32> to vector<8x128xf32>
    %176 = arith.negf %175 : vector<8x128xf32>
    %177 = math.exp %176 : vector<8x128xf32>
    %cst_53 = arith.constant 1.000000e+00 : f32
    %178 = vector.broadcast %cst_53 : f32 to vector<8x128xf32>
    %179 = arith.addf %178, %177 : vector<8x128xf32>
    %180 = arith.divf %178, %179 : vector<8x128xf32>
    %181 = vector.extract_strided_slice %162 {offsets = [0, 384], sizes = [8, 128], strides = [1, 1]} : vector<8x512xf32> to vector<8x128xf32>
    %182 = math.tanh %181 : vector<8x128xf32>
    %183 = arith.mulf %174, %156 : vector<8x128xf32>
    %184 = arith.mulf %168, %182 : vector<8x128xf32>
    %185 = arith.addf %183, %184 : vector<8x128xf32>
    %186 = math.tanh %185 : vector<8x128xf32>
    %187 = arith.mulf %180, %186 : vector<8x128xf32>
    %c40_54 = arith.constant 40 : index
    %c0_55 = arith.constant 0 : index
    %188 = vector.load %arg12[%c40_54, %c0_55] : memref<64x128xf32, #tpu.memory_space<vmem>>, vector<8x128xf32>
    tpu.vector_store %arg12[%c40_54, %c0_55], %187 {strides = array<i32>} : memref<64x128xf32, #tpu.memory_space<vmem>>, vector<8x128xf32>,
    %c48 = arith.constant 48 : index
    %c0_56 = arith.constant 0 : index
    %189 = vector.load %arg11[%c48, %c0_56] : memref<64x512xf32, #tpu.memory_space<vmem>>, vector<8x512xf32>
    %cst_57 = arith.constant dense<0.000000e+00> : vector<8x512xf32>
    %190 = tpu.matmul %187, %12, %cst_57 {dimension_numbers = #tpu.dot_dimension_numbers<[1], [0], [0], [1], [0, 0, 1, 1], [], []>} : vector<8x128xf32>, vector<128x512xf32>, vector<8x512xf32> -> vector<8x512xf32>
    %191 = arith.addf %189, %190 : vector<8x512xf32>
    %192 = vector.extract_strided_slice %191 {offsets = [0, 0], sizes = [8, 128], strides = [1, 1]} : vector<8x512xf32> to vector<8x128xf32>
    %193 = arith.negf %192 : vector<8x128xf32>
    %194 = math.exp %193 : vector<8x128xf32>
    %cst_58 = arith.constant 1.000000e+00 : f32
    %195 = vector.broadcast %cst_58 : f32 to vector<8x128xf32>
    %196 = arith.addf %195, %194 : vector<8x128xf32>
    %197 = arith.divf %195, %196 : vector<8x128xf32>
    %198 = vector.extract_strided_slice %191 {offsets = [0, 128], sizes = [8, 128], strides = [1, 1]} : vector<8x512xf32> to vector<8x128xf32>
    %199 = arith.negf %198 : vector<8x128xf32>
    %200 = math.exp %199 : vector<8x128xf32>
    %cst_59 = arith.constant 1.000000e+00 : f32
    %201 = vector.broadcast %cst_59 : f32 to vector<8x128xf32>
    %202 = arith.addf %201, %200 : vector<8x128xf32>
    %203 = arith.divf %201, %202 : vector<8x128xf32>
    %204 = vector.extract_strided_slice %191 {offsets = [0, 256], sizes = [8, 128], strides = [1, 1]} : vector<8x512xf32> to vector<8x128xf32>
    %205 = arith.negf %204 : vector<8x128xf32>
    %206 = math.exp %205 : vector<8x128xf32>
    %cst_60 = arith.constant 1.000000e+00 : f32
    %207 = vector.broadcast %cst_60 : f32 to vector<8x128xf32>
    %208 = arith.addf %207, %206 : vector<8x128xf32>
    %209 = arith.divf %207, %208 : vector<8x128xf32>
    %210 = vector.extract_strided_slice %191 {offsets = [0, 384], sizes = [8, 128], strides = [1, 1]} : vector<8x512xf32> to vector<8x128xf32>
    %211 = math.tanh %210 : vector<8x128xf32>
    %212 = arith.mulf %203, %185 : vector<8x128xf32>
    %213 = arith.mulf %197, %211 : vector<8x128xf32>
    %214 = arith.addf %212, %213 : vector<8x128xf32>
    %215 = math.tanh %214 : vector<8x128xf32>
    %216 = arith.mulf %209, %215 : vector<8x128xf32>
    %c48_61 = arith.constant 48 : index
    %c0_62 = arith.constant 0 : index
    %217 = vector.load %arg12[%c48_61, %c0_62] : memref<64x128xf32, #tpu.memory_space<vmem>>, vector<8x128xf32>
    tpu.vector_store %arg12[%c48_61, %c0_62], %216 {strides = array<i32>} : memref<64x128xf32, #tpu.memory_space<vmem>>, vector<8x128xf32>,
    %c56 = arith.constant 56 : index
    %c0_63 = arith.constant 0 : index
    %218 = vector.load %arg11[%c56, %c0_63] : memref<64x512xf32, #tpu.memory_space<vmem>>, vector<8x512xf32>
    %cst_64 = arith.constant dense<0.000000e+00> : vector<8x512xf32>
    %219 = tpu.matmul %216, %12, %cst_64 {dimension_numbers = #tpu.dot_dimension_numbers<[1], [0], [0], [1], [0, 0, 1, 1], [], []>} : vector<8x128xf32>, vector<128x512xf32>, vector<8x512xf32> -> vector<8x512xf32>
    %220 = arith.addf %218, %219 : vector<8x512xf32>
    %221 = vector.extract_strided_slice %220 {offsets = [0, 0], sizes = [8, 128], strides = [1, 1]} : vector<8x512xf32> to vector<8x128xf32>
    %222 = arith.negf %221 : vector<8x128xf32>
    %223 = math.exp %222 : vector<8x128xf32>
    %cst_65 = arith.constant 1.000000e+00 : f32
    %224 = vector.broadcast %cst_65 : f32 to vector<8x128xf32>
    %225 = arith.addf %224, %223 : vector<8x128xf32>
    %226 = arith.divf %224, %225 : vector<8x128xf32>
    %227 = vector.extract_strided_slice %220 {offsets = [0, 128], sizes = [8, 128], strides = [1, 1]} : vector<8x512xf32> to vector<8x128xf32>
    %228 = arith.negf %227 : vector<8x128xf32>
    %229 = math.exp %228 : vector<8x128xf32>
    %cst_66 = arith.constant 1.000000e+00 : f32
    %230 = vector.broadcast %cst_66 : f32 to vector<8x128xf32>
    %231 = arith.addf %230, %229 : vector<8x128xf32>
    %232 = arith.divf %230, %231 : vector<8x128xf32>
    %233 = vector.extract_strided_slice %220 {offsets = [0, 256], sizes = [8, 128], strides = [1, 1]} : vector<8x512xf32> to vector<8x128xf32>
    %234 = arith.negf %233 : vector<8x128xf32>
    %235 = math.exp %234 : vector<8x128xf32>
    %cst_67 = arith.constant 1.000000e+00 : f32
    %236 = vector.broadcast %cst_67 : f32 to vector<8x128xf32>
    %237 = arith.addf %236, %235 : vector<8x128xf32>
    %238 = arith.divf %236, %237 : vector<8x128xf32>
    %239 = vector.extract_strided_slice %220 {offsets = [0, 384], sizes = [8, 128], strides = [1, 1]} : vector<8x512xf32> to vector<8x128xf32>
    %240 = math.tanh %239 : vector<8x128xf32>
    %241 = arith.mulf %232, %214 : vector<8x128xf32>
    %242 = arith.mulf %226, %240 : vector<8x128xf32>
    %243 = arith.addf %241, %242 : vector<8x128xf32>
    %244 = math.tanh %243 : vector<8x128xf32>
    %245 = arith.mulf %238, %244 : vector<8x128xf32>
    %c56_68 = arith.constant 56 : index
    %c0_69 = arith.constant 0 : index
    %246 = vector.load %arg12[%c56_68, %c0_69] : memref<64x128xf32, #tpu.memory_space<vmem>>, vector<8x128xf32>
    tpu.vector_store %arg12[%c56_68, %c0_69], %245 {strides = array<i32>} : memref<64x128xf32, #tpu.memory_space<vmem>>, vector<8x128xf32>,
    %c0_70 = arith.constant 0 : index
    %c0_71 = arith.constant 0 : index
    %247 = vector.load %arg12[%c0_70, %c0_71] : memref<64x128xf32, #tpu.memory_space<vmem>>, vector<64x128xf32>
    %c0_72 = arith.constant 0 : index
    %c0_73 = arith.constant 0 : index
    %248 = vector.load %arg6[%c0_72, %c0_73] : memref<128x128xf32, #tpu.memory_space<vmem>>, vector<128x128xf32>
    %cst_74 = arith.constant dense<0.000000e+00> : vector<64x128xf32>
    %249 = tpu.matmul %247, %248, %cst_74 {dimension_numbers = #tpu.dot_dimension_numbers<[1], [0], [0], [1], [0, 0, 1, 1], [], []>} : vector<64x128xf32>, vector<128x128xf32>, vector<64x128xf32> -> vector<64x128xf32>
    %c0_75 = arith.constant 0 : index
    %c0_76 = arith.constant 0 : index
    %250 = memref.load %arg7[%c0_75, %c0_76] : memref<1x1xf32, #tpu.memory_space<smem>>
    %251 = vector.broadcast %250 : f32 to vector<64x128xf32>
    %252 = arith.addf %249, %251 : vector<64x128xf32>
    %c0_77 = arith.constant 0 : index
    %c0_78 = arith.constant 0 : index
    %253 = vector.load %arg8[%c0_77, %c0_78] : memref<64x128xf32, #tpu.memory_space<vmem>>, vector<64x128xf32>
    tpu.vector_store %arg8[%c0_77, %c0_78], %252 {strides = array<i32>} : memref<64x128xf32, #tpu.memory_space<vmem>>, vector<64x128xf32>,
    %c0_79 = arith.constant 0 : index
    %c0_80 = arith.constant 0 : index
    %254 = vector.load %arg9[%c0_79, %c0_80] : memref<8x128xf32, #tpu.memory_space<vmem>>, vector<8x128xf32>
    tpu.vector_store %arg9[%c0_79, %c0_80], %245 {strides = array<i32>} : memref<8x128xf32, #tpu.memory_space<vmem>>, vector<8x128xf32>,
    %c0_81 = arith.constant 0 : index
    %c0_82 = arith.constant 0 : index
    %255 = vector.load %arg10[%c0_81, %c0_82] : memref<8x128xf32, #tpu.memory_space<vmem>>, vector<8x128xf32>
    tpu.vector_store %arg10[%c0_81, %c0_82], %243 {strides = array<i32>} : memref<8x128xf32, #tpu.memory_space<vmem>>, vector<8x128xf32>,
    return
  }
}

</mosaic_0001>

<llo_original>
// kernel: tpu_custom_call.1
$region0: #{tpu_custom_call.1}
  #allocation0 [shape = 'u32[]', space=smem, size = 0x4, offset = 0x4, fixed_abs, tag = 'smem constant byte address 0x4 - core index']
  #allocation1 [shape = 'u32[144,128]{1,0:T(1,128)}', space=vmem, size = 0x12000, scoped, tag = 'internal scratch']
  #allocation2 [shape = 'f32[64,512]{1,0:T(8,128)}', space=vmem, size = 0x20000, scoped, tag = 'scratch operand']
  #allocation3 [shape = 'f32[64,128]{1,0:T(8,128)}', space=vmem, size = 0x8000, scoped, tag = 'scratch operand']
  #allocation4 [shape = 'f32[1,1]{1,0:T(1,128)S(6)}', space=smem, size = 0x200, scoped, tag = 'scoped memory for tpu_custom_call.1']
  %s0 = inlined_call_operand.vmem [shape: s32[64,1], index: 0, kind: input, shape index: {}]
  %s1 = inlined_call_operand.vmem [shape: f32[8,128], index: 1, kind: input, shape index: {}]
  %s2 = inlined_call_operand.vmem [shape: f32[8,128], index: 2, kind: input, shape index: {}]
  %s3 = inlined_call_operand.hbm [shape: f32[128,512], index: 3, kind: input, shape index: {}]
  %s4 = inlined_call_operand.hbm [shape: f32[128,512], index: 4, kind: input, shape index: {}]
  %s5 = inlined_call_operand.vmem [shape: f32[1,512], index: 5, kind: input, shape index: {}]
  %s6 = inlined_call_operand.hbm [shape: f32[128,128], index: 6, kind: input, shape index: {}]
  %s7 = inlined_call_operand.<no memory space> [shape: f32[1,1], index: 7, kind: input, shape index: {}]
  %s8 = inlined_call_operand.hbm [shape: f32[64,128], index: 8, kind: output, shape index: {0}]
  %s9 = inlined_call_operand.hbm [shape: f32[8,128], index: 9, kind: output, shape index: {1}]
  %s10 = inlined_call_operand.hbm [shape: f32[8,128], index: 10, kind: output, shape index: {2}]
  %11 = xla_tuple %s8, %s9, %s10
  %s12 = sld [smem:[#allocation0]]
  $region70: #{tpu_custom_call.1} parent=0
    _
  %s14 = ssub.s32 1, %s12
  %s15 = scalar_select 0, %s14, %s12
  %16 = sst [smem:[#allocation4]] %s7
  $region1: #{tpu_custom_call.1} parent=0
    #allocation5 [shape = 'u8[262144]{0}', space=vmem, size = 0x40000, scoped, tag = 'input window, operand 3, single buffered']
    #allocation6 [shape = 's32[1]{0}', space=sflag, size = 0x4, scoped, tag = 'scoped memory for tpu_custom_call.1']
    #allocation7 [shape = 's32[1]{0}', space=sflag, size = 0x4, scoped, tag = 'scoped memory for tpu_custom_call.1']
    #allocation8 [shape = 'u8[262144]{0}', space=vmem, size = 0x40000, scoped, tag = 'input window, operand 4, single buffered']
    #allocation9 [shape = 's32[1]{0}', space=sflag, size = 0x4, scoped, tag = 'scoped memory for tpu_custom_call.1']
    #allocation10 [shape = 'u8[65536]{0}', space=vmem, size = 0x10000, scoped, tag = 'input window, operand 6, single buffered']
    #allocation11 [shape = 'u8[32768]{0}', space=vmem, size = 0x8000, scoped, tag = 'output window, operand 0, single buffered']
    #allocation12 [shape = 'u8[4096]{0}', space=vmem, size = 0x1000, scoped, tag = 'output window, operand 1, single buffered']
    #allocation13 [shape = 's32[1]{0}', space=sflag, size = 0x4, scoped, tag = 'scoped memory for tpu_custom_call.1']
    #allocation14 [shape = 'u8[4096]{0}', space=vmem, size = 0x1000, scoped, tag = 'output window, operand 2, single buffered']
    %17 = vsyncpa [#allocation6], 0
    %18 = vsyncpa [#allocation9], 0
    %19 = vsyncpa [#allocation7], 0
    %20 = vsyncpa [#allocation13], 0
    // Predicated region
    $region2: #{tpu_custom_call.1} parent=1 // pred_check
      _
    $region3: #{tpu_custom_call.1} parent=1 // pred_check_branch
      %22 = sbr.rel (0) target = $region5
    $region4: #{tpu_custom_call.1} parent=1 // pred_region
      _
    $region5: #{tpu_custom_call.1} parent=1 // pred_fallthru
      _
    // Predicated region
    $region6: #{tpu_custom_call.1} parent=1 // pred_check
      _
    $region7: #{tpu_custom_call.1} parent=1 // pred_check_branch
      %24 = sbr.rel (0) target = $region9
    $region8: #{tpu_custom_call.1} parent=1 // pred_region
      _
    $region9: #{tpu_custom_call.1} parent=1 // pred_fallthru
      _
    // Predicated region
    $region10: #{tpu_custom_call.1} parent=1 // pred_check
      _
    $region11: #{tpu_custom_call.1} parent=1 // pred_check_branch
      %26 = sbr.rel (0) target = $region13
    $region12: #{tpu_custom_call.1} parent=1 // pred_region
      _
    $region13: #{tpu_custom_call.1} parent=1 // pred_fallthru
      _
    // Predicated region
    $region14: #{tpu_custom_call.1} parent=1 // pred_check
      _
    $region15: #{tpu_custom_call.1} parent=1 // pred_check_branch
      %28 = sbr.rel (0) target = $region17
    $region16: #{tpu_custom_call.1} parent=1 // pred_region
      %s30 = ssub.s32 8192, 8192
      %31 = vsyncadd [#allocation6], %s30
      %s32 = sshll.u32 [#allocation5], 4
      %s33 = int_to_ptr.vmem [resolvable:$true] %s32
      %38 = dma.hbm_to_vmem [thread:$0]  %s3, 8192, %s33, [#allocation6], 512, 512, 32
    $region17: #{tpu_custom_call.1} parent=1 // pred_fallthru
      _
    // Predicated region
    $region18: #{tpu_custom_call.1} parent=1 // pred_check
      _
    $region19: #{tpu_custom_call.1} parent=1 // pred_check_branch
      %40 = sbr.rel (0) target = $region21
    $region20: #{tpu_custom_call.1} parent=1 // pred_region
      %s42 = ssub.s32 8192, 8192
      %43 = vsyncadd [#allocation9], %s42
      %s44 = sshll.u32 [#allocation8], 4
      %s45 = int_to_ptr.vmem [resolvable:$true] %s44
      %50 = dma.hbm_to_vmem [thread:$0]  %s4, 8192, %s45, [#allocation9], 512, 512, 32
    $region21: #{tpu_custom_call.1} parent=1 // pred_fallthru
      _
    // Predicated region
    $region22: #{tpu_custom_call.1} parent=1 // pred_check
      _
    $region23: #{tpu_custom_call.1} parent=1 // pred_check_branch
      %52 = sbr.rel (0) target = $region25
    $region24: #{tpu_custom_call.1} parent=1 // pred_region
      _
    $region25: #{tpu_custom_call.1} parent=1 // pred_fallthru
      _
    // Predicated region
    $region26: #{tpu_custom_call.1} parent=1 // pred_check
      _
    $region27: #{tpu_custom_call.1} parent=1 // pred_check_branch
      %54 = sbr.rel (0) target = $region29
    $region28: #{tpu_custom_call.1} parent=1 // pred_region
      %s56 = ssub.s32 2048, 2048
      %57 = vsyncadd [#allocation9], %s56
      %s58 = sshll.u32 [#allocation10], 4
      %s59 = int_to_ptr.vmem [resolvable:$true] %s58
      %64 = dma.hbm_to_vmem [thread:$0]  %s6, 2048, %s59, [#allocation9], 128, 128, 8
    $region29: #{tpu_custom_call.1} parent=1 // pred_fallthru
      _
    // Predicated region
    $region30: #{tpu_custom_call.1} parent=1 // pred_check
      _
    $region31: #{tpu_custom_call.1} parent=1 // pred_check_branch
      %66 = sbr.rel (0) target = $region33
    $region32: #{tpu_custom_call.1} parent=1 // pred_region
      _
    $region33: #{tpu_custom_call.1} parent=1 // pred_fallthru
      _
    // Predicated region
    $region34: #{tpu_custom_call.1} parent=1 // pred_check
      _
    $region35: #{tpu_custom_call.1} parent=1 // pred_check_branch
      %68 = sbr.rel (0) target = $region37
    $region36: #{tpu_custom_call.1} parent=1 // pred_region
      %69 = dma.done [#allocation6], 8192
    $region37: #{tpu_custom_call.1} parent=1 // pred_fallthru
      _
    // Predicated region
    $region38: #{tpu_custom_call.1} parent=1 // pred_check
      _
    $region39: #{tpu_custom_call.1} parent=1 // pred_check_branch
      %71 = sbr.rel (0) target = $region41
    $region40: #{tpu_custom_call.1} parent=1 // pred_region
      %72 = dma.done [#allocation9], 8192
    $region41: #{tpu_custom_call.1} parent=1 // pred_fallthru
      _
    // Predicated region
    $region42: #{tpu_custom_call.1} parent=1 // pred_check
      _
    $region43: #{tpu_custom_call.1} parent=1 // pred_check_branch
      %74 = sbr.rel (0) target = $region45
    $region44: #{tpu_custom_call.1} parent=1 // pred_region
      %75 = dma.done [#allocation9], 2048
    $region45: #{tpu_custom_call.1} parent=1 // pred_fallthru
      _
    %v76 = vlaneseq
    %v77 = vand.u32 %v76, 127
    %v78 = vld [vmem:[%s0] sm:$0xff]
    %v79 = vld [vmem:[%s0 + $0x8] sm:$0xff]
    %v80 = vld [vmem:[%s0 + $0x10] sm:$0xff]
    %v81 = vld [vmem:[%s0 + $0x18] sm:$0xff]
    %v82 = vld [vmem:[%s0 + $0x20] sm:$0xff]
    %v83 = vld [vmem:[%s0 + $0x28] sm:$0xff]
    %v84 = vld [vmem:[%s0 + $0x30] sm:$0xff]
    %v85 = vld [vmem:[%s0 + $0x38] sm:$0xff]
    %86 = vset.pattern.permute.xlu0 0
    %87 = vperm.xlu0 %86, %v78
    %v88 = vpop.permute.xlu0 %87
    %89 = vset.pattern.permute.xlu0 0
    %90 = vperm.xlu0 %89, %v79
    %v91 = vpop.permute.xlu0 %90
    %92 = vset.pattern.permute.xlu0 0
    %93 = vperm.xlu0 %92, %v80
    %v94 = vpop.permute.xlu0 %93
    %95 = vset.pattern.permute.xlu0 0
    %96 = vperm.xlu0 %95, %v81
    %v97 = vpop.permute.xlu0 %96
    %98 = vset.pattern.permute.xlu0 0
    %99 = vperm.xlu0 %98, %v82
    %v100 = vpop.permute.xlu0 %99
    %101 = vset.pattern.permute.xlu0 0
    %102 = vperm.xlu0 %101, %v83
    %v103 = vpop.permute.xlu0 %102
    %104 = vset.pattern.permute.xlu0 0
    %105 = vperm.xlu0 %104, %v84
    %v106 = vpop.permute.xlu0 %105
    %107 = vset.pattern.permute.xlu0 0
    %108 = vperm.xlu0 %107, %v85
    %v109 = vpop.permute.xlu0 %108
    %vm110 = vcmp.eq.s32.totalorder %v77, %v88
    %vm111 = vcmp.eq.s32.totalorder %v77, %v91
    %vm112 = vcmp.eq.s32.totalorder %v77, %v94
    %vm113 = vcmp.eq.s32.totalorder %v77, %v97
    %vm114 = vcmp.eq.s32.totalorder %v77, %v100
    %vm115 = vcmp.eq.s32.totalorder %v77, %v103
    %vm116 = vcmp.eq.s32.totalorder %v77, %v106
    %vm117 = vcmp.eq.s32.totalorder %v77, %v109
    %v118 = vsel %vm110, 1, 0
    %v119 = vsel %vm111, 1, 0
    %v120 = vsel %vm112, 1, 0
    %v121 = vsel %vm113, 1, 0
    %v122 = vsel %vm114, 1, 0
    %v123 = vsel %vm115, 1, 0
    %v124 = vsel %vm116, 1, 0
    %v125 = vsel %vm117, 1, 0
    %v126 = vcvt.s32.f32 %v118
    %v127 = vcvt.s32.f32 %v119
    %v128 = vcvt.s32.f32 %v120
    %v129 = vcvt.s32.f32 %v121
    %v130 = vcvt.s32.f32 %v122
    %v131 = vcvt.s32.f32 %v123
    %v132 = vcvt.s32.f32 %v124
    %v133 = vcvt.s32.f32 %v125
    %v134 = vld [vmem:[#allocation5] sm:$0xff]
    %v135 = vld [vmem:[#allocation5 + $0x8] sm:$0xff]
    %v136 = vld [vmem:[#allocation5 + $0x10] sm:$0xff]
    %v137 = vld [vmem:[#allocation5 + $0x18] sm:$0xff]
    %v138 = vld [vmem:[#allocation5 + $0x20] sm:$0xff]
    %v139 = vld [vmem:[#allocation5 + $0x28] sm:$0xff]
    %v140 = vld [vmem:[#allocation5 + $0x30] sm:$0xff]
    %v141 = vld [vmem:[#allocation5 + $0x38] sm:$0xff]
    %v142 = vld [vmem:[#allocation5 + $0x40] sm:$0xff]
    %v143 = vld [vmem:[#allocation5 + $0x48] sm:$0xff]
    %v144 = vld [vmem:[#allocation5 + $0x50] sm:$0xff]
    %v145 = vld [vmem:[#allocation5 + $0x58] sm:$0xff]
    %v146 = vld [vmem:[#allocation5 + $0x60] sm:$0xff]
    %v147 = vld [vmem:[#allocation5 + $0x68] sm:$0xff]
    %v148 = vld [vmem:[#allocation5 + $0x70] sm:$0xff]
    %v149 = vld [vmem:[#allocation5 + $0x78] sm:$0xff]
    %v150 = vld [vmem:[#allocation5 + $0x80] sm:$0xff]
    %v151 = vld [vmem:[#allocation5 + $0x88] sm:$0xff]
    %v152 = vld [vmem:[#allocation5 + $0x90] sm:$0xff]
    %v153 = vld [vmem:[#allocation5 + $0x98] sm:$0xff]
    %v154 = vld [vmem:[#allocation5 + $0xa0] sm:$0xff]
    %v155 = vld [vmem:[#allocation5 + $0xa8] sm:$0xff]
    %v156 = vld [vmem:[#allocation5 + $0xb0] sm:$0xff]
    %v157 = vld [vmem:[#allocation5 + $0xb8] sm:$0xff]
    %v158 = vld [vmem:[#allocation5 + $0xc0] sm:$0xff]
    %v159 = vld [vmem:[#allocation5 + $0xc8] sm:$0xff]
    %v160 = vld [vmem:[#allocation5 + $0xd0] sm:$0xff]
    %v161 = vld [vmem:[#allocation5 + $0xd8] sm:$0xff]
    %v162 = vld [vmem:[#allocation5 + $0xe0] sm:$0xff]
    %v163 = vld [vmem:[#allocation5 + $0xe8] sm:$0xff]
    %v164 = vld [vmem:[#allocation5 + $0xf0] sm:$0xff]
    %v165 = vld [vmem:[#allocation5 + $0xf8] sm:$0xff]
    %v166 = vld [vmem:[#allocation5 + $0x100] sm:$0xff]
    %v167 = vld [vmem:[#allocation5 + $0x108] sm:$0xff]
    %v168 = vld [vmem:[#allocation5 + $0x110] sm:$0xff]
    %v169 = vld [vmem:[#allocation5 + $0x118] sm:$0xff]
    %v170 = vld [vmem:[#allocation5 + $0x120] sm:$0xff]
    %v171 = vld [vmem:[#allocation5 + $0x128] sm:$0xff]
    %v172 = vld [vmem:[#allocation5 + $0x130] sm:$0xff]
    %v173 = vld [vmem:[#allocation5 + $0x138] sm:$0xff]
    %v174 = vld [vmem:[#allocation5 + $0x140] sm:$0xff]
    %v175 = vld [vmem:[#allocation5 + $0x148] sm:$0xff]
    %v176 = vld [vmem:[#allocation5 + $0x150] sm:$0xff]
    %v177 = vld [vmem:[#allocation5 + $0x158] sm:$0xff]
    %v178 = vld [vmem:[#allocation5 + $0x160] sm:$0xff]
    %v179 = vld [vmem:[#allocation5 + $0x168] sm:$0xff]
    %v180 = vld [vmem:[#allocation5 + $0x170] sm:$0xff]
    %v181 = vld [vmem:[#allocation5 + $0x178] sm:$0xff]
    %v182 = vld [vmem:[#allocation5 + $0x180] sm:$0xff]
    %v183 = vld [vmem:[#allocation5 + $0x188] sm:$0xff]
    %v184 = vld [vmem:[#allocation5 + $0x190] sm:$0xff]
    %v185 = vld [vmem:[#allocation5 + $0x198] sm:$0xff]
    %v186 = vld [vmem:[#allocation5 + $0x1a0] sm:$0xff]
    %v187 = vld [vmem:[#allocation5 + $0x1a8] sm:$0xff]
    %v188 = vld [vmem:[#allocation5 + $0x1b0] sm:$0xff]
    %v189 = vld [vmem:[#allocation5 + $0x1b8] sm:$0xff]
    %v190 = vld [vmem:[#allocation5 + $0x1c0] sm:$0xff]
    %v191 = vld [vmem:[#allocation5 + $0x1c8] sm:$0xff]
    %v192 = vld [vmem:[#allocation5 + $0x1d0] sm:$0xff]
    %v193 = vld [vmem:[#allocation5 + $0x1d8] sm:$0xff]
    %v194 = vld [vmem:[#allocation5 + $0x1e0] sm:$0xff]
    %v195 = vld [vmem:[#allocation5 + $0x1e8] sm:$0xff]
    %v196 = vld [vmem:[#allocation5 + $0x1f0] sm:$0xff]
    %v197 = vld [vmem:[#allocation5 + $0x1f8] sm:$0xff]
    %v198 = vld [vmem:[%s5] sm:$0xf]
    %v200 = vlaneseq
    %v201 = vshrl.u32 %v200, 7
    %v202 = vsub.s32 0, %v201
    %v203 = vrot.slane %v198, %v202
    %v204 = vlaneseq
    %v205 = vshrl.u32 %v204, 7
    %v206 = vsub.s32 1, %v205
    %v207 = vrot.slane %v198, %v206
    %v208 = vlaneseq
    %v209 = vshrl.u32 %v208, 7
    %v210 = vsub.s32 2, %v209
    %v211 = vrot.slane %v198, %v210
    %v212 = vlaneseq
    %v213 = vshrl.u32 %v212, 7
    %v214 = vsub.s32 3, %v213
    %v215 = vrot.slane %v198, %v214
    %220 = vmatprep.subr.mxu0 %v195
    %221 = vmatpush1.msra.mxu0 %v194
    %222 = vmatprep.subr.mxu0 %v191
    %223 = vmatpush1.msra.mxu0 %v190
    %224 = vmatprep.subr.mxu0 %v187
    %225 = vmatpush1.msra.mxu0 %v186
    %226 = vmatprep.subr.mxu0 %v183
    %227 = vmatpush1.msra.mxu0 %v182
    %228 = vmatprep.subr.mxu0 %v179
    %229 = vmatpush1.msra.mxu0 %v178
    %230 = vmatprep.subr.mxu0 %v175
    %231 = vmatpush1.msra.mxu0 %v174
    %232 = vmatprep.subr.mxu0 %v171
    %233 = vmatpush1.msra.mxu0 %v170
    %234 = vmatprep.subr.mxu0 %v167
    %235 = vmatpush1.msra.mxu0 %v166
    %236 = vmatprep.subr.mxu0 %v163
    %237 = vmatpush1.msra.mxu0 %v162
    %238 = vmatprep.subr.mxu0 %v159
    %239 = vmatpush1.msra.mxu0 %v158
    %240 = vmatprep.subr.mxu0 %v155
    %241 = vmatpush1.msra.mxu0 %v154
    %242 = vmatprep.subr.mxu0 %v151
    %243 = vmatpush1.msra.mxu0 %v150
    %244 = vmatprep.subr.mxu0 %v147
    %245 = vmatpush1.msra.mxu0 %v146
    %246 = vmatprep.subr.mxu0 %v143
    %247 = vmatpush1.msra.mxu0 %v142
    %248 = vmatprep.subr.mxu0 %v139
    %249 = vmatpush1.msra.mxu0 %v138
    %250 = vmatprep.subr.mxu0 %v135
    %251 = vmatpush1.msra.mxu0 %v134
    %252 = vmatprep.subr.mxu0 0.0
    %253 = vmatpush2.msra.mxu0 0.0
    %254 = vmatprep.subr.mxu0 0.0
    %255 = vmatpush2.msra.mxu0 0.0
    %256 = vmatprep.subr.mxu0 0.0
    %257 = vmatpush2.msra.mxu0 0.0
    %258 = vmatprep.subr.mxu0 0.0
    %259 = vmatpush2.msra.mxu0 0.0
    %260 = vmatprep.subr.mxu0 0.0
    %261 = vmatpush2.msra.mxu0 0.0
    %262 = vmatprep.subr.mxu0 0.0
    %263 = vmatpush2.msra.mxu0 0.0
    %264 = vmatprep.subr.mxu0 0.0
    %265 = vmatpush2.msra.mxu0 0.0
    %266 = vmatprep.subr.mxu0 0.0
    %267 = vmatpush2.msra.mxu0 0.0
    %268 = vmatprep.subr.mxu0 0.0
    %269 = vmatpush2.msra.mxu0 0.0
    %270 = vmatprep.subr.mxu0 0.0
    %271 = vmatpush2.msra.mxu0 0.0
    %272 = vmatprep.subr.mxu0 0.0
    %273 = vmatpush2.msra.mxu0 0.0
    %274 = vmatprep.subr.mxu0 0.0
    %275 = vmatpush2.msra.mxu0 0.0
    %276 = vmatprep.subr.mxu0 0.0
    %277 = vmatpush2.msra.mxu0 0.0
    %278 = vmatprep.subr.mxu0 0.0
    %279 = vmatpush2.msra.mxu0 0.0
    %280 = vmatprep.subr.mxu0 0.0
    %281 = vmatpush2.msra.mxu0 0.0
    %282 = vmatprep.subr.mxu0 0.0
    %283 = vmatpush2.msra.mxu0 0.0
    %284 = vmatprep.mubr.f32.mxu0 0.0
    %285 = vmatmul.mubr.f32.gmra.mxu0 %v126
    %v286 = vpop.f32.mrf.mxu0
    %v287 = vadd.f32 %v203, %v286
    %v288 = vpop.f32.mrf.mxu0
    %v289 = vadd.f32 %v207, %v288
    %290 = vmatprep.mubr.f32.mxu0 0.0
    %291 = vmatmul.mubr.f32.gmra.mxu0 %v127
    %v292 = vpop.f32.mrf.mxu0
    %v293 = vadd.f32 %v203, %v292
    %v294 = vpop.f32.mrf.mxu0
    %v295 = vadd.f32 %v207, %v294
    %296 = vmatprep.mubr.f32.mxu0 0.0
    %297 = vmatmul.mubr.f32.gmra.mxu0 %v128
    %v298 = vpop.f32.mrf.mxu0
    %v299 = vadd.f32 %v203, %v298
    %v300 = vpop.f32.mrf.mxu0
    %v301 = vadd.f32 %v207, %v300
    %302 = vmatprep.mubr.f32.mxu0 0.0
    %303 = vmatmul.mubr.f32.gmra.mxu0 %v129
    %v304 = vpop.f32.mrf.mxu0
    %v305 = vadd.f32 %v203, %v304
    %v306 = vpop.f32.mrf.mxu0
    %v307 = vadd.f32 %v207, %v306
    %308 = vmatprep.mubr.f32.mxu0 0.0
    %309 = vmatmul.mubr.f32.gmra.mxu0 %v130
    %v310 = vpop.f32.mrf.mxu0
    %v311 = vadd.f32 %v203, %v310
    %v312 = vpop.f32.mrf.mxu0
    %v313 = vadd.f32 %v207, %v312
    %314 = vmatprep.mubr.f32.mxu0 0.0
    %315 = vmatmul.mubr.f32.gmra.mxu0 %v131
    %v316 = vpop.f32.mrf.mxu0
    %v317 = vadd.f32 %v203, %v316
    %v318 = vpop.f32.mrf.mxu0
    %v319 = vadd.f32 %v207, %v318
    %320 = vmatprep.mubr.f32.mxu0 0.0
    %321 = vmatmul.mubr.f32.gmra.mxu0 %v132
    %v322 = vpop.f32.mrf.mxu0
    %v323 = vadd.f32 %v203, %v322
    %v324 = vpop.f32.mrf.mxu0
    %v325 = vadd.f32 %v207, %v324
    %326 = vmatprep.mubr.f32.mxu0 0.0
    %327 = vmatmul.mubr.f32.gmra.mxu0 %v133
    %v328 = vpop.f32.mrf.mxu0
    %v329 = vadd.f32 %v203, %v328
    %v330 = vpop.f32.mrf.mxu0
    %v331 = vadd.f32 %v207, %v330
    %332 = vdwg.mxu0
    %333 = vmatprep.subr.mxu0 %v197
    %334 = vmatpush1.msra.mxu0 %v196
    %335 = vmatprep.subr.mxu0 %v193
    %336 = vmatpush1.msra.mxu0 %v192
    %337 = vmatprep.subr.mxu0 %v189
    %338 = vmatpush1.msra.mxu0 %v188
    %339 = vmatprep.subr.mxu0 %v185
    %340 = vmatpush1.msra.mxu0 %v184
    %341 = vmatprep.subr.mxu0 %v181
    %342 = vmatpush1.msra.mxu0 %v180
    %343 = vmatprep.subr.mxu0 %v177
    %344 = vmatpush1.msra.mxu0 %v176
    %345 = vmatprep.subr.mxu0 %v173
    %346 = vmatpush1.msra.mxu0 %v172
    %347 = vmatprep.subr.mxu0 %v169
    %348 = vmatpush1.msra.mxu0 %v168
    %349 = vmatprep.subr.mxu0 %v165
    %350 = vmatpush1.msra.mxu0 %v164
    %351 = vmatprep.subr.mxu0 %v161
    %352 = vmatpush1.msra.mxu0 %v160
    %353 = vmatprep.subr.mxu0 %v157
    %354 = vmatpush1.msra.mxu0 %v156
    %355 = vmatprep.subr.mxu0 %v153
    %356 = vmatpush1.msra.mxu0 %v152
    %357 = vmatprep.subr.mxu0 %v149
    %358 = vmatpush1.msra.mxu0 %v148
    %359 = vmatprep.subr.mxu0 %v145
    %360 = vmatpush1.msra.mxu0 %v144
    %361 = vmatprep.subr.mxu0 %v141
    %362 = vmatpush1.msra.mxu0 %v140
    %363 = vmatprep.subr.mxu0 %v137
    %364 = vmatpush1.msra.mxu0 %v136
    %365 = vmatprep.subr.mxu0 0.0
    %366 = vmatpush2.msra.mxu0 0.0
    %367 = vmatprep.subr.mxu0 0.0
    %368 = vmatpush2.msra.mxu0 0.0
    %369 = vmatprep.subr.mxu0 0.0
    %370 = vmatpush2.msra.mxu0 0.0
    %371 = vmatprep.subr.mxu0 0.0
    %372 = vmatpush2.msra.mxu0 0.0
    %373 = vmatprep.subr.mxu0 0.0
    %374 = vmatpush2.msra.mxu0 0.0
    %375 = vmatprep.subr.mxu0 0.0
    %376 = vmatpush2.msra.mxu0 0.0
    %377 = vmatprep.subr.mxu0 0.0
    %378 = vmatpush2.msra.mxu0 0.0
    %379 = vmatprep.subr.mxu0 0.0
    %380 = vmatpush2.msra.mxu0 0.0
    %381 = vmatprep.subr.mxu0 0.0
    %382 = vmatpush2.msra.mxu0 0.0
    %383 = vmatprep.subr.mxu0 0.0
    %384 = vmatpush2.msra.mxu0 0.0
    %385 = vmatprep.subr.mxu0 0.0
    %386 = vmatpush2.msra.mxu0 0.0
    %387 = vmatprep.subr.mxu0 0.0
    %388 = vmatpush2.msra.mxu0 0.0
    %389 = vmatprep.subr.mxu0 0.0
    %390 = vmatpush2.msra.mxu0 0.0
    %391 = vmatprep.subr.mxu0 0.0
    %392 = vmatpush2.msra.mxu0 0.0
    %393 = vmatprep.subr.mxu0 0.0
    %394 = vmatpush2.msra.mxu0 0.0
    %395 = vmatprep.subr.mxu0 0.0
    %396 = vmatpush2.msra.mxu0 0.0
    %397 = vmatprep.mubr.f32.mxu0 0.0
    %398 = vmatmul.mubr.f32.gmra.mxu0 %v126
    %v399 = vpop.f32.mrf.mxu0
    %v400 = vadd.f32 %v211, %v399
    %v401 = vpop.f32.mrf.mxu0
    %v402 = vadd.f32 %v215, %v401
    %403 = vmatprep.mubr.f32.mxu0 0.0
    %404 = vmatmul.mubr.f32.gmra.mxu0 %v127
    %v405 = vpop.f32.mrf.mxu0
    %v406 = vadd.f32 %v211, %v405
    %v407 = vpop.f32.mrf.mxu0
    %v408 = vadd.f32 %v215, %v407
    %409 = vmatprep.mubr.f32.mxu0 0.0
    %410 = vmatmul.mubr.f32.gmra.mxu0 %v128
    %v411 = vpop.f32.mrf.mxu0
    %v412 = vadd.f32 %v211, %v411
    %v413 = vpop.f32.mrf.mxu0
    %v414 = vadd.f32 %v215, %v413
    %415 = vmatprep.mubr.f32.mxu0 0.0
    %416 = vmatmul.mubr.f32.gmra.mxu0 %v129
    %v417 = vpop.f32.mrf.mxu0
    %v418 = vadd.f32 %v211, %v417
    %v419 = vpop.f32.mrf.mxu0
    %v420 = vadd.f32 %v215, %v419
    %421 = vmatprep.mubr.f32.mxu0 0.0
    %422 = vmatmul.mubr.f32.gmra.mxu0 %v130
    %v423 = vpop.f32.mrf.mxu0
    %v424 = vadd.f32 %v211, %v423
    %v425 = vpop.f32.mrf.mxu0
    %v426 = vadd.f32 %v215, %v425
    %427 = vmatprep.mubr.f32.mxu0 0.0
    %428 = vmatmul.mubr.f32.gmra.mxu0 %v131
    %v429 = vpop.f32.mrf.mxu0
    %v430 = vadd.f32 %v211, %v429
    %v431 = vpop.f32.mrf.mxu0
    %v432 = vadd.f32 %v215, %v431
    %433 = vmatprep.mubr.f32.mxu0 0.0
    %434 = vmatmul.mubr.f32.gmra.mxu0 %v132
    %v435 = vpop.f32.mrf.mxu0
    %v436 = vadd.f32 %v211, %v435
    %v437 = vpop.f32.mrf.mxu0
    %v438 = vadd.f32 %v215, %v437
    %439 = vmatprep.mubr.f32.mxu0 0.0
    %440 = vmatmul.mubr.f32.gmra.mxu0 %v133
    %v441 = vpop.f32.mrf.mxu0
    %v442 = vadd.f32 %v211, %v441
    %v443 = vpop.f32.mrf.mxu0
    %v444 = vadd.f32 %v215, %v443
    %445 = vdwg.mxu0
    %446 = vst [vmem:[#allocation2] sm:$0xff] %v287
    %447 = vst [vmem:[#allocation2 + $0x8] sm:$0xff] %v289
    %448 = vst [vmem:[#allocation2 + $0x10] sm:$0xff] %v400
    %449 = vst [vmem:[#allocation2 + $0x18] sm:$0xff] %v402
    %450 = vst [vmem:[#allocation2 + $0x20] sm:$0xff] %v293
    %451 = vst [vmem:[#allocation2 + $0x28] sm:$0xff] %v295
    %452 = vst [vmem:[#allocation2 + $0x30] sm:$0xff] %v406
    %453 = vst [vmem:[#allocation2 + $0x38] sm:$0xff] %v408
    %454 = vst [vmem:[#allocation2 + $0x40] sm:$0xff] %v299
    %455 = vst [vmem:[#allocation2 + $0x48] sm:$0xff] %v301
    %456 = vst [vmem:[#allocation2 + $0x50] sm:$0xff] %v412
    %457 = vst [vmem:[#allocation2 + $0x58] sm:$0xff] %v414
    %458 = vst [vmem:[#allocation2 + $0x60] sm:$0xff] %v305
    %459 = vst [vmem:[#allocation2 + $0x68] sm:$0xff] %v307
    %460 = vst [vmem:[#allocation2 + $0x70] sm:$0xff] %v418
    %461 = vst [vmem:[#allocation2 + $0x78] sm:$0xff] %v420
    %462 = vst [vmem:[#allocation2 + $0x80] sm:$0xff] %v311
    %463 = vst [vmem:[#allocation2 + $0x88] sm:$0xff] %v313
    %464 = vst [vmem:[#allocation2 + $0x90] sm:$0xff] %v424
    %465 = vst [vmem:[#allocation2 + $0x98] sm:$0xff] %v426
    %466 = vst [vmem:[#allocation2 + $0xa0] sm:$0xff] %v317
    %467 = vst [vmem:[#allocation2 + $0xa8] sm:$0xff] %v319
    %468 = vst [vmem:[#allocation2 + $0xb0] sm:$0xff] %v430
    %469 = vst [vmem:[#allocation2 + $0xb8] sm:$0xff] %v432
    %470 = vst [vmem:[#allocation2 + $0xc0] sm:$0xff] %v323
    %471 = vst [vmem:[#allocation2 + $0xc8] sm:$0xff] %v325
    %472 = vst [vmem:[#allocation2 + $0xd0] sm:$0xff] %v436
    %473 = vst [vmem:[#allocation2 + $0xd8] sm:$0xff] %v438
    %474 = vst [vmem:[#allocation2 + $0xe0] sm:$0xff] %v329
    %475 = vst [vmem:[#allocation2 + $0xe8] sm:$0xff] %v331
    %476 = vst [vmem:[#allocation2 + $0xf0] sm:$0xff] %v442
    %477 = vst [vmem:[#allocation2 + $0xf8] sm:$0xff] %v444
    %v478 = vld [vmem:[#allocation8] sm:$0xff]
    %v479 = vld [vmem:[#allocation8 + $0x8] sm:$0xff]
    %v480 = vld [vmem:[#allocation8 + $0x10] sm:$0xff]
    %v481 = vld [vmem:[#allocation8 + $0x18] sm:$0xff]
    %v482 = vld [vmem:[#allocation8 + $0x20] sm:$0xff]
    %v483 = vld [vmem:[#allocation8 + $0x28] sm:$0xff]
    %v484 = vld [vmem:[#allocation8 + $0x30] sm:$0xff]
    %v485 = vld [vmem:[#allocation8 + $0x38] sm:$0xff]
    %v486 = vld [vmem:[#allocation8 + $0x40] sm:$0xff]
    %v487 = vld [vmem:[#allocation8 + $0x48] sm:$0xff]
    %v488 = vld [vmem:[#allocation8 + $0x50] sm:$0xff]
    %v489 = vld [vmem:[#allocation8 + $0x58] sm:$0xff]
    %v490 = vld [vmem:[#allocation8 + $0x60] sm:$0xff]
    %v491 = vld [vmem:[#allocation8 + $0x68] sm:$0xff]
    %v492 = vld [vmem:[#allocation8 + $0x70] sm:$0xff]
    %v493 = vld [vmem:[#allocation8 + $0x78] sm:$0xff]
    %v494 = vld [vmem:[#allocation8 + $0x80] sm:$0xff]
    %v495 = vld [vmem:[#allocation8 + $0x88] sm:$0xff]
    %v496 = vld [vmem:[#allocation8 + $0x90] sm:$0xff]
    %v497 = vld [vmem:[#allocation8 + $0x98] sm:$0xff]
    %v498 = vld [vmem:[#allocation8 + $0xa0] sm:$0xff]
    %v499 = vld [vmem:[#allocation8 + $0xa8] sm:$0xff]
    %v500 = vld [vmem:[#allocation8 + $0xb0] sm:$0xff]
    %v501 = vld [vmem:[#allocation8 + $0xb8] sm:$0xff]
    %v502 = vld [vmem:[#allocation8 + $0xc0] sm:$0xff]
    %v503 = vld [vmem:[#allocation8 + $0xc8] sm:$0xff]
    %v504 = vld [vmem:[#allocation8 + $0xd0] sm:$0xff]
    %v505 = vld [vmem:[#allocation8 + $0xd8] sm:$0xff]
    %v506 = vld [vmem:[#allocation8 + $0xe0] sm:$0xff]
    %v507 = vld [vmem:[#allocation8 + $0xe8] sm:$0xff]
    %v508 = vld [vmem:[#allocation8 + $0xf0] sm:$0xff]
    %v509 = vld [vmem:[#allocation8 + $0xf8] sm:$0xff]
    %v510 = vld [vmem:[#allocation8 + $0x100] sm:$0xff]
    %v511 = vld [vmem:[#allocation8 + $0x108] sm:$0xff]
    %v512 = vld [vmem:[#allocation8 + $0x110] sm:$0xff]
    %v513 = vld [vmem:[#allocation8 + $0x118] sm:$0xff]
    %v514 = vld [vmem:[#allocation8 + $0x120] sm:$0xff]
    %v515 = vld [vmem:[#allocation8 + $0x128] sm:$0xff]
    %v516 = vld [vmem:[#allocation8 + $0x130] sm:$0xff]
    %v517 = vld [vmem:[#allocation8 + $0x138] sm:$0xff]
    %v518 = vld [vmem:[#allocation8 + $0x140] sm:$0xff]
    %v519 = vld [vmem:[#allocation8 + $0x148] sm:$0xff]
    %v520 = vld [vmem:[#allocation8 + $0x150] sm:$0xff]
    %v521 = vld [vmem:[#allocation8 + $0x158] sm:$0xff]
    %v522 = vld [vmem:[#allocation8 + $0x160] sm:$0xff]
    %v523 = vld [vmem:[#allocation8 + $0x168] sm:$0xff]
    %v524 = vld [vmem:[#allocation8 + $0x170] sm:$0xff]
    %v525 = vld [vmem:[#allocation8 + $0x178] sm:$0xff]
    %v526 = vld [vmem:[#allocation8 + $0x180] sm:$0xff]
    %v527 = vld [vmem:[#allocation8 + $0x188] sm:$0xff]
    %v528 = vld [vmem:[#allocation8 + $0x190] sm:$0xff]
    %v529 = vld [vmem:[#allocation8 + $0x198] sm:$0xff]
    %v530 = vld [vmem:[#allocation8 + $0x1a0] sm:$0xff]
    %v531 = vld [vmem:[#allocation8 + $0x1a8] sm:$0xff]
    %v532 = vld [vmem:[#allocation8 + $0x1b0] sm:$0xff]
    %v533 = vld [vmem:[#allocation8 + $0x1b8] sm:$0xff]
    %v534 = vld [vmem:[#allocation8 + $0x1c0] sm:$0xff]
    %v535 = vld [vmem:[#allocation8 + $0x1c8] sm:$0xff]
    %v536 = vld [vmem:[#allocation8 + $0x1d0] sm:$0xff]
    %v537 = vld [vmem:[#allocation8 + $0x1d8] sm:$0xff]
    %v538 = vld [vmem:[#allocation8 + $0x1e0] sm:$0xff]
    %v539 = vld [vmem:[#allocation8 + $0x1e8] sm:$0xff]
    %v540 = vld [vmem:[#allocation8 + $0x1f0] sm:$0xff]
    %v541 = vld [vmem:[#allocation8 + $0x1f8] sm:$0xff]
    %v542 = vld [vmem:[%s1] sm:$0xff]
    %v543 = vld [vmem:[%s2] sm:$0xff]
    %v544 = vld [vmem:[#allocation2] sm:$0xff]
    %v545 = vld [vmem:[#allocation2 + $0x8] sm:$0xff]
    %v546 = vld [vmem:[#allocation2 + $0x10] sm:$0xff]
    %v547 = vld [vmem:[#allocation2 + $0x18] sm:$0xff]
    %548 = vmatprep.subr.mxu0 %v539
    %549 = vmatpush1.msra.mxu0 %v538
    %550 = vmatprep.subr.mxu0 %v535
    %551 = vmatpush1.msra.mxu0 %v534
    %552 = vmatprep.subr.mxu0 %v531
    %553 = vmatpush1.msra.mxu0 %v530
    %554 = vmatprep.subr.mxu0 %v527
    %555 = vmatpush1.msra.mxu0 %v526
    %556 = vmatprep.subr.mxu0 %v523
    %557 = vmatpush1.msra.mxu0 %v522
    %558 = vmatprep.subr.mxu0 %v519
    %559 = vmatpush1.msra.mxu0 %v518
    %560 = vmatprep.subr.mxu0 %v515
    %561 = vmatpush1.msra.mxu0 %v514
    %562 = vmatprep.subr.mxu0 %v511
    %563 = vmatpush1.msra.mxu0 %v510
    %564 = vmatprep.subr.mxu0 %v507
    %565 = vmatpush1.msra.mxu0 %v506
    %566 = vmatprep.subr.mxu0 %v503
    %567 = vmatpush1.msra.mxu0 %v502
    %568 = vmatprep.subr.mxu0 %v499
    %569 = vmatpush1.msra.mxu0 %v498
    %570 = vmatprep.subr.mxu0 %v495
    %571 = vmatpush1.msra.mxu0 %v494
    %572 = vmatprep.subr.mxu0 %v491
    %573 = vmatpush1.msra.mxu0 %v490
    %574 = vmatprep.subr.mxu0 %v487
    %575 = vmatpush1.msra.mxu0 %v486
    %576 = vmatprep.subr.mxu0 %v483
    %577 = vmatpush1.msra.mxu0 %v482
    %578 = vmatprep.subr.mxu0 %v479
    %579 = vmatpush1.msra.mxu0 %v478
    %580 = vmatprep.subr.mxu0 0.0
    %581 = vmatpush2.msra.mxu0 0.0
    %582 = vmatprep.subr.mxu0 0.0
    %583 = vmatpush2.msra.mxu0 0.0
    %584 = vmatprep.subr.mxu0 0.0
    %585 = vmatpush2.msra.mxu0 0.0
    %586 = vmatprep.subr.mxu0 0.0
    %587 = vmatpush2.msra.mxu0 0.0
    %588 = vmatprep.subr.mxu0 0.0
    %589 = vmatpush2.msra.mxu0 0.0
    %590 = vmatprep.subr.mxu0 0.0
    %591 = vmatpush2.msra.mxu0 0.0
    %592 = vmatprep.subr.mxu0 0.0
    %593 = vmatpush2.msra.mxu0 0.0
    %594 = vmatprep.subr.mxu0 0.0
    %595 = vmatpush2.msra.mxu0 0.0
    %596 = vmatprep.subr.mxu0 0.0
    %597 = vmatpush2.msra.mxu0 0.0
    %598 = vmatprep.subr.mxu0 0.0
    %599 = vmatpush2.msra.mxu0 0.0
    %600 = vmatprep.subr.mxu0 0.0
    %601 = vmatpush2.msra.mxu0 0.0
    %602 = vmatprep.subr.mxu0 0.0
    %603 = vmatpush2.msra.mxu0 0.0
    %604 = vmatprep.subr.mxu0 0.0
    %605 = vmatpush2.msra.mxu0 0.0
    %606 = vmatprep.subr.mxu0 0.0
    %607 = vmatpush2.msra.mxu0 0.0
    %608 = vmatprep.subr.mxu0 0.0
    %609 = vmatpush2.msra.mxu0 0.0
    %610 = vmatprep.subr.mxu0 0.0
    %611 = vmatpush2.msra.mxu0 0.0
    %612 = vmatprep.mubr.f32.mxu0 0.0
    %613 = vmatmul.mubr.f32.gmra.mxu0 %v542
    %v614 = vpop.f32.mrf.mxu0
    %v615 = vadd.f32 0.0, %v614
    %v616 = vpop.f32.mrf.mxu0
    %v617 = vadd.f32 0.0, %v616
    %618 = vdwg.mxu0
    %619 = vmatprep.subr.mxu0 %v541
    %620 = vmatpush1.msra.mxu0 %v540
    %621 = vmatprep.subr.mxu0 %v537
    %622 = vmatpush1.msra.mxu0 %v536
    %623 = vmatprep.subr.mxu0 %v533
    %624 = vmatpush1.msra.mxu0 %v532
    %625 = vmatprep.subr.mxu0 %v529
    %626 = vmatpush1.msra.mxu0 %v528
    %627 = vmatprep.subr.mxu0 %v525
    %628 = vmatpush1.msra.mxu0 %v524
    %629 = vmatprep.subr.mxu0 %v521
    %630 = vmatpush1.msra.mxu0 %v520
    %631 = vmatprep.subr.mxu0 %v517
    %632 = vmatpush1.msra.mxu0 %v516
    %633 = vmatprep.subr.mxu0 %v513
    %634 = vmatpush1.msra.mxu0 %v512
    %635 = vmatprep.subr.mxu0 %v509
    %636 = vmatpush1.msra.mxu0 %v508
    %637 = vmatprep.subr.mxu0 %v505
    %638 = vmatpush1.msra.mxu0 %v504
    %639 = vmatprep.subr.mxu0 %v501
    %640 = vmatpush1.msra.mxu0 %v500
    %641 = vmatprep.subr.mxu0 %v497
    %642 = vmatpush1.msra.mxu0 %v496
    %643 = vmatprep.subr.mxu0 %v493
    %644 = vmatpush1.msra.mxu0 %v492
    %645 = vmatprep.subr.mxu0 %v489
    %646 = vmatpush1.msra.mxu0 %v488
    %647 = vmatprep.subr.mxu0 %v485
    %648 = vmatpush1.msra.mxu0 %v484
    %649 = vmatprep.subr.mxu0 %v481
    %650 = vmatpush1.msra.mxu0 %v480
    %651 = vmatprep.subr.mxu0 0.0
    %652 = vmatpush2.msra.mxu0 0.0
    %653 = vmatprep.subr.mxu0 0.0
    %654 = vmatpush2.msra.mxu0 0.0
    %655 = vmatprep.subr.mxu0 0.0
    %656 = vmatpush2.msra.mxu0 0.0
    %657 = vmatprep.subr.mxu0 0.0
    %658 = vmatpush2.msra.mxu0 0.0
    %659 = vmatprep.subr.mxu0 0.0
    %660 = vmatpush2.msra.mxu0 0.0
    %661 = vmatprep.subr.mxu0 0.0
    %662 = vmatpush2.msra.mxu0 0.0
    %663 = vmatprep.subr.mxu0 0.0
    %664 = vmatpush2.msra.mxu0 0.0
    %665 = vmatprep.subr.mxu0 0.0
    %666 = vmatpush2.msra.mxu0 0.0
    %667 = vmatprep.subr.mxu0 0.0
    %668 = vmatpush2.msra.mxu0 0.0
    %669 = vmatprep.subr.mxu0 0.0
    %670 = vmatpush2.msra.mxu0 0.0
    %671 = vmatprep.subr.mxu0 0.0
    %672 = vmatpush2.msra.mxu0 0.0
    %673 = vmatprep.subr.mxu0 0.0
    %674 = vmatpush2.msra.mxu0 0.0
    %675 = vmatprep.subr.mxu0 0.0
    %676 = vmatpush2.msra.mxu0 0.0
    %677 = vmatprep.subr.mxu0 0.0
    %678 = vmatpush2.msra.mxu0 0.0
    %679 = vmatprep.subr.mxu0 0.0
    %680 = vmatpush2.msra.mxu0 0.0
    %681 = vmatprep.subr.mxu0 0.0
    %682 = vmatpush2.msra.mxu0 0.0
    %683 = vmatprep.mubr.f32.mxu0 0.0
    %684 = vmatmul.mubr.f32.gmra.mxu0 %v542
    %v685 = vpop.f32.mrf.mxu0
    %v686 = vadd.f32 0.0, %v685
    %v687 = vpop.f32.mrf.mxu0
    %v688 = vadd.f32 0.0, %v687
    %689 = vdwg.mxu0
    %v690 = vadd.f32 %v544, %v615
    %v691 = vadd.f32 %v545, %v617
    %v692 = vadd.f32 %v546, %v686
    %v693 = vadd.f32 %v547, %v688
    %v694 = vxor.u32 %v690, 2147483648
    %v695 = vmul.f32 %v694, 1.442695
    %v696 = vpow.pop %v695
    %v697 = vadd.f32 %v696, 1.0
    %v698 = vrcp.pop %v697
    %v699 = vmul.f32 1.0, %v698
    %v700 = vxor.u32 %v691, 2147483648
    %v701 = vmul.f32 %v700, 1.442695
    %v702 = vpow.pop %v701
    %v703 = vadd.f32 %v702, 1.0
    %v704 = vrcp.pop %v703
    %v705 = vmul.f32 1.0, %v704
    %v706 = vxor.u32 %v692, 2147483648
    %v707 = vmul.f32 %v706, 1.442695
    %v708 = vpow.pop %v707
    %v709 = vadd.f32 %v708, 1.0
    %v710 = vrcp.pop %v709
    %v711 = vmul.f32 1.0, %v710
    %v712 = vtanh.pop %v693
    %v713 = vmul.f32 %v705, %v543
    %v714 = vmul.f32 %v699, %v712
    %v715 = vadd.f32 %v713, %v714
    %v716 = vtanh.pop %v715
    %v717 = vmul.f32 %v711, %v716
    %718 = vst [vmem:[#allocation3] sm:$0xff] %v717
    %v719 = vld [vmem:[#allocation2 + $0x20] sm:$0xff]
    %v720 = vld [vmem:[#allocation2 + $0x28] sm:$0xff]
    %v721 = vld [vmem:[#allocation2 + $0x30] sm:$0xff]
    %v722 = vld [vmem:[#allocation2 + $0x38] sm:$0xff]
    %723 = vmatprep.subr.mxu0 %v539
    %724 = vmatpush1.msra.mxu0 %v538
    %725 = vmatprep.subr.mxu0 %v535
    %726 = vmatpush1.msra.mxu0 %v534
    %727 = vmatprep.subr.mxu0 %v531
    %728 = vmatpush1.msra.mxu0 %v530
    %729 = vmatprep.subr.mxu0 %v527
    %730 = vmatpush1.msra.mxu0 %v526
    %731 = vmatprep.subr.mxu0 %v523
    %732 = vmatpush1.msra.mxu0 %v522
    %733 = vmatprep.subr.mxu0 %v519
    %734 = vmatpush1.msra.mxu0 %v518
    %735 = vmatprep.subr.mxu0 %v515
    %736 = vmatpush1.msra.mxu0 %v514
    %737 = vmatprep.subr.mxu0 %v511
    %738 = vmatpush1.msra.mxu0 %v510
    %739 = vmatprep.subr.mxu0 %v507
    %740 = vmatpush1.msra.mxu0 %v506
    %741 = vmatprep.subr.mxu0 %v503
    %742 = vmatpush1.msra.mxu0 %v502
    %743 = vmatprep.subr.mxu0 %v499
    %744 = vmatpush1.msra.mxu0 %v498
    %745 = vmatprep.subr.mxu0 %v495
    %746 = vmatpush1.msra.mxu0 %v494
    %747 = vmatprep.subr.mxu0 %v491
    %748 = vmatpush1.msra.mxu0 %v490
    %749 = vmatprep.subr.mxu0 %v487
    %750 = vmatpush1.msra.mxu0 %v486
    %751 = vmatprep.subr.mxu0 %v483
    %752 = vmatpush1.msra.mxu0 %v482
    %753 = vmatprep.subr.mxu0 %v479
    %754 = vmatpush1.msra.mxu0 %v478
    %755 = vmatprep.subr.mxu0 0.0
    %756 = vmatpush2.msra.mxu0 0.0
    %757 = vmatprep.subr.mxu0 0.0
    %758 = vmatpush2.msra.mxu0 0.0
    %759 = vmatprep.subr.mxu0 0.0
    %760 = vmatpush2.msra.mxu0 0.0
    %761 = vmatprep.subr.mxu0 0.0
    %762 = vmatpush2.msra.mxu0 0.0
    %763 = vmatprep.subr.mxu0 0.0
    %764 = vmatpush2.msra.mxu0 0.0
    %765 = vmatprep.subr.mxu0 0.0
    %766 = vmatpush2.msra.mxu0 0.0
    %767 = vmatprep.subr.mxu0 0.0
    %768 = vmatpush2.msra.mxu0 0.0
    %769 = vmatprep.subr.mxu0 0.0
    %770 = vmatpush2.msra.mxu0 0.0
    %771 = vmatprep.subr.mxu0 0.0
    %772 = vmatpush2.msra.mxu0 0.0
    %773 = vmatprep.subr.mxu0 0.0
    %774 = vmatpush2.msra.mxu0 0.0
    %775 = vmatprep.subr.mxu0 0.0
    %776 = vmatpush2.msra.mxu0 0.0
    %777 = vmatprep.subr.mxu0 0.0
    %778 = vmatpush2.msra.mxu0 0.0
    %779 = vmatprep.subr.mxu0 0.0
    %780 = vmatpush2.msra.mxu0 0.0
    %781 = vmatprep.subr.mxu0 0.0
    %782 = vmatpush2.msra.mxu0 0.0
    %783 = vmatprep.subr.mxu0 0.0
    %784 = vmatpush2.msra.mxu0 0.0
    %785 = vmatprep.subr.mxu0 0.0
    %786 = vmatpush2.msra.mxu0 0.0
    %787 = vmatprep.mubr.f32.mxu0 0.0
    %788 = vmatmul.mubr.f32.gmra.mxu0 %v717
    %v789 = vpop.f32.mrf.mxu0
    %v790 = vadd.f32 0.0, %v789
    %v791 = vpop.f32.mrf.mxu0
    %v792 = vadd.f32 0.0, %v791
    %793 = vdwg.mxu0
    %794 = vmatprep.subr.mxu0 %v541
    %795 = vmatpush1.msra.mxu0 %v540
    %796 = vmatprep.subr.mxu0 %v537
    %797 = vmatpush1.msra.mxu0 %v536
    %798 = vmatprep.subr.mxu0 %v533
    %799 = vmatpush1.msra.mxu0 %v532
    %800 = vmatprep.subr.mxu0 %v529
    %801 = vmatpush1.msra.mxu0 %v528
    %802 = vmatprep.subr.mxu0 %v525
    %803 = vmatpush1.msra.mxu0 %v524
    %804 = vmatprep.subr.mxu0 %v521
    %805 = vmatpush1.msra.mxu0 %v520
    %806 = vmatprep.subr.mxu0 %v517
    %807 = vmatpush1.msra.mxu0 %v516
    %808 = vmatprep.subr.mxu0 %v513
    %809 = vmatpush1.msra.mxu0 %v512
    %810 = vmatprep.subr.mxu0 %v509
    %811 = vmatpush1.msra.mxu0 %v508
    %812 = vmatprep.subr.mxu0 %v505
    %813 = vmatpush1.msra.mxu0 %v504
    %814 = vmatprep.subr.mxu0 %v501
    %815 = vmatpush1.msra.mxu0 %v500
    %816 = vmatprep.subr.mxu0 %v497
    %817 = vmatpush1.msra.mxu0 %v496
    %818 = vmatprep.subr.mxu0 %v493
    %819 = vmatpush1.msra.mxu0 %v492
    %820 = vmatprep.subr.mxu0 %v489
    %821 = vmatpush1.msra.mxu0 %v488
    %822 = vmatprep.subr.mxu0 %v485
    %823 = vmatpush1.msra.mxu0 %v484
    %824 = vmatprep.subr.mxu0 %v481
    %825 = vmatpush1.msra.mxu0 %v480
    %826 = vmatprep.subr.mxu0 0.0
    %827 = vmatpush2.msra.mxu0 0.0
    %828 = vmatprep.subr.mxu0 0.0
    %829 = vmatpush2.msra.mxu0 0.0
    %830 = vmatprep.subr.mxu0 0.0
    %831 = vmatpush2.msra.mxu0 0.0
    %832 = vmatprep.subr.mxu0 0.0
    %833 = vmatpush2.msra.mxu0 0.0
    %834 = vmatprep.subr.mxu0 0.0
    %835 = vmatpush2.msra.mxu0 0.0
    %836 = vmatprep.subr.mxu0 0.0
    %837 = vmatpush2.msra.mxu0 0.0
    %838 = vmatprep.subr.mxu0 0.0
    %839 = vmatpush2.msra.mxu0 0.0
    %840 = vmatprep.subr.mxu0 0.0
    %841 = vmatpush2.msra.mxu0 0.0
    %842 = vmatprep.subr.mxu0 0.0
    %843 = vmatpush2.msra.mxu0 0.0
    %844 = vmatprep.subr.mxu0 0.0
    %845 = vmatpush2.msra.mxu0 0.0
    %846 = vmatprep.subr.mxu0 0.0
    %847 = vmatpush2.msra.mxu0 0.0
    %848 = vmatprep.subr.mxu0 0.0
    %849 = vmatpush2.msra.mxu0 0.0
    %850 = vmatprep.subr.mxu0 0.0
    %851 = vmatpush2.msra.mxu0 0.0
    %852 = vmatprep.subr.mxu0 0.0
    %853 = vmatpush2.msra.mxu0 0.0
    %854 = vmatprep.subr.mxu0 0.0
    %855 = vmatpush2.msra.mxu0 0.0
    %856 = vmatprep.subr.mxu0 0.0
    %857 = vmatpush2.msra.mxu0 0.0
    %858 = vmatprep.mubr.f32.mxu0 0.0
    %859 = vmatmul.mubr.f32.gmra.mxu0 %v717
    %v860 = vpop.f32.mrf.mxu0
    %v861 = vadd.f32 0.0, %v860
    %v862 = vpop.f32.mrf.mxu0
    %v863 = vadd.f32 0.0, %v862
    %864 = vdwg.mxu0
    %v865 = vadd.f32 %v719, %v790
    %v866 = vadd.f32 %v720, %v792
    %v867 = vadd.f32 %v721, %v861
    %v868 = vadd.f32 %v722, %v863
    %v869 = vxor.u32 %v865, 2147483648
    %v870 = vmul.f32 %v869, 1.442695
    %v871 = vpow.pop %v870
    %v872 = vadd.f32 %v871, 1.0
    %v873 = vrcp.pop %v872
    %v874 = vmul.f32 1.0, %v873
    %v875 = vxor.u32 %v866, 2147483648
    %v876 = vmul.f32 %v875, 1.442695
    %v877 = vpow.pop %v876
    %v878 = vadd.f32 %v877, 1.0
    %v879 = vrcp.pop %v878
    %v880 = vmul.f32 1.0, %v879
    %v881 = vxor.u32 %v867, 2147483648
    %v882 = vmul.f32 %v881, 1.442695
    %v883 = vpow.pop %v882
    %v884 = vadd.f32 %v883, 1.0
    %v885 = vrcp.pop %v884
    %v886 = vmul.f32 1.0, %v885
    %v887 = vtanh.pop %v868
    %v888 = vmul.f32 %v880, %v715
    %v889 = vmul.f32 %v874, %v887
    %v890 = vadd.f32 %v888, %v889
    %v891 = vtanh.pop %v890
    %v892 = vmul.f32 %v886, %v891
    %893 = vst [vmem:[#allocation3 + $0x8] sm:$0xff] %v892
    %v894 = vld [vmem:[#allocation2 + $0x40] sm:$0xff]
    %v895 = vld [vmem:[#allocation2 + $0x48] sm:$0xff]
    %v896 = vld [vmem:[#allocation2 + $0x50] sm:$0xff]
    %v897 = vld [vmem:[#allocation2 + $0x58] sm:$0xff]
    %898 = vmatprep.subr.mxu0 %v539
    %899 = vmatpush1.msra.mxu0 %v538
    %900 = vmatprep.subr.mxu0 %v535
    %901 = vmatpush1.msra.mxu0 %v534
    %902 = vmatprep.subr.mxu0 %v531
    %903 = vmatpush1.msra.mxu0 %v530
    %904 = vmatprep.subr.mxu0 %v527
    %905 = vmatpush1.msra.mxu0 %v526
    %906 = vmatprep.subr.mxu0 %v523
    %907 = vmatpush1.msra.mxu0 %v522
    %908 = vmatprep.subr.mxu0 %v519
    %909 = vmatpush1.msra.mxu0 %v518
    %910 = vmatprep.subr.mxu0 %v515
    %911 = vmatpush1.msra.mxu0 %v514
    %912 = vmatprep.subr.mxu0 %v511
    %913 = vmatpush1.msra.mxu0 %v510
    %914 = vmatprep.subr.mxu0 %v507
    %915 = vmatpush1.msra.mxu0 %v506
    %916 = vmatprep.subr.mxu0 %v503
    %917 = vmatpush1.msra.mxu0 %v502
    %918 = vmatprep.subr.mxu0 %v499
    %919 = vmatpush1.msra.mxu0 %v498
    %920 = vmatprep.subr.mxu0 %v495
    %921 = vmatpush1.msra.mxu0 %v494
    %922 = vmatprep.subr.mxu0 %v491
    %923 = vmatpush1.msra.mxu0 %v490
    %924 = vmatprep.subr.mxu0 %v487
    %925 = vmatpush1.msra.mxu0 %v486
    %926 = vmatprep.subr.mxu0 %v483
    %927 = vmatpush1.msra.mxu0 %v482
    %928 = vmatprep.subr.mxu0 %v479
    %929 = vmatpush1.msra.mxu0 %v478
    %930 = vmatprep.subr.mxu0 0.0
    %931 = vmatpush2.msra.mxu0 0.0
    %932 = vmatprep.subr.mxu0 0.0
    %933 = vmatpush2.msra.mxu0 0.0
    %934 = vmatprep.subr.mxu0 0.0
    %935 = vmatpush2.msra.mxu0 0.0
    %936 = vmatprep.subr.mxu0 0.0
    %937 = vmatpush2.msra.mxu0 0.0
    %938 = vmatprep.subr.mxu0 0.0
    %939 = vmatpush2.msra.mxu0 0.0
    %940 = vmatprep.subr.mxu0 0.0
    %941 = vmatpush2.msra.mxu0 0.0
    %942 = vmatprep.subr.mxu0 0.0
    %943 = vmatpush2.msra.mxu0 0.0
    %944 = vmatprep.subr.mxu0 0.0
    %945 = vmatpush2.msra.mxu0 0.0
    %946 = vmatprep.subr.mxu0 0.0
    %947 = vmatpush2.msra.mxu0 0.0
    %948 = vmatprep.subr.mxu0 0.0
    %949 = vmatpush2.msra.mxu0 0.0
    %950 = vmatprep.subr.mxu0 0.0
    %951 = vmatpush2.msra.mxu0 0.0
    %952 = vmatprep.subr.mxu0 0.0
    %953 = vmatpush2.msra.mxu0 0.0
    %954 = vmatprep.subr.mxu0 0.0
    %955 = vmatpush2.msra.mxu0 0.0
    %956 = vmatprep.subr.mxu0 0.0
    %957 = vmatpush2.msra.mxu0 0.0
    %958 = vmatprep.subr.mxu0 0.0
    %959 = vmatpush2.msra.mxu0 0.0
    %960 = vmatprep.subr.mxu0 0.0
    %961 = vmatpush2.msra.mxu0 0.0
    %962 = vmatprep.mubr.f32.mxu0 0.0
    %963 = vmatmul.mubr.f32.gmra.mxu0 %v892
    %v964 = vpop.f32.mrf.mxu0
    %v965 = vadd.f32 0.0, %v964
    %v966 = vpop.f32.mrf.mxu0
    %v967 = vadd.f32 0.0, %v966
    %968 = vdwg.mxu0
    %969 = vmatprep.subr.mxu0 %v541
    %970 = vmatpush1.msra.mxu0 %v540
    %971 = vmatprep.subr.mxu0 %v537
    %972 = vmatpush1.msra.mxu0 %v536
    %973 = vmatprep.subr.mxu0 %v533
    %974 = vmatpush1.msra.mxu0 %v532
    %975 = vmatprep.subr.mxu0 %v529
    %976 = vmatpush1.msra.mxu0 %v528
    %977 = vmatprep.subr.mxu0 %v525
    %978 = vmatpush1.msra.mxu0 %v524
    %979 = vmatprep.subr.mxu0 %v521
    %980 = vmatpush1.msra.mxu0 %v520
    %981 = vmatprep.subr.mxu0 %v517
    %982 = vmatpush1.msra.mxu0 %v516
    %983 = vmatprep.subr.mxu0 %v513
    %984 = vmatpush1.msra.mxu0 %v512
    %985 = vmatprep.subr.mxu0 %v509
    %986 = vmatpush1.msra.mxu0 %v508
    %987 = vmatprep.subr.mxu0 %v505
    %988 = vmatpush1.msra.mxu0 %v504
    %989 = vmatprep.subr.mxu0 %v501
    %990 = vmatpush1.msra.mxu0 %v500
    %991 = vmatprep.subr.mxu0 %v497
    %992 = vmatpush1.msra.mxu0 %v496
    %993 = vmatprep.subr.mxu0 %v493
    %994 = vmatpush1.msra.mxu0 %v492
    %995 = vmatprep.subr.mxu0 %v489
    %996 = vmatpush1.msra.mxu0 %v488
    %997 = vmatprep.subr.mxu0 %v485
    %998 = vmatpush1.msra.mxu0 %v484
    %999 = vmatprep.subr.mxu0 %v481
    %1000 = vmatpush1.msra.mxu0 %v480
    %1001 = vmatprep.subr.mxu0 0.0
    %1002 = vmatpush2.msra.mxu0 0.0
    %1003 = vmatprep.subr.mxu0 0.0
    %1004 = vmatpush2.msra.mxu0 0.0
    %1005 = vmatprep.subr.mxu0 0.0
    %1006 = vmatpush2.msra.mxu0 0.0
    %1007 = vmatprep.subr.mxu0 0.0
    %1008 = vmatpush2.msra.mxu0 0.0
    %1009 = vmatprep.subr.mxu0 0.0
    %1010 = vmatpush2.msra.mxu0 0.0
    %1011 = vmatprep.subr.mxu0 0.0
    %1012 = vmatpush2.msra.mxu0 0.0
    %1013 = vmatprep.subr.mxu0 0.0
    %1014 = vmatpush2.msra.mxu0 0.0
    %1015 = vmatprep.subr.mxu0 0.0
    %1016 = vmatpush2.msra.mxu0 0.0
    %1017 = vmatprep.subr.mxu0 0.0
    %1018 = vmatpush2.msra.mxu0 0.0
    %1019 = vmatprep.subr.mxu0 0.0
    %1020 = vmatpush2.msra.mxu0 0.0
    %1021 = vmatprep.subr.mxu0 0.0
    %1022 = vmatpush2.msra.mxu0 0.0
    %1023 = vmatprep.subr.mxu0 0.0
    %1024 = vmatpush2.msra.mxu0 0.0
    %1025 = vmatprep.subr.mxu0 0.0
    %1026 = vmatpush2.msra.mxu0 0.0
    %1027 = vmatprep.subr.mxu0 0.0
    %1028 = vmatpush2.msra.mxu0 0.0
    %1029 = vmatprep.subr.mxu0 0.0
    %1030 = vmatpush2.msra.mxu0 0.0
    %1031 = vmatprep.subr.mxu0 0.0
    %1032 = vmatpush2.msra.mxu0 0.0
    %1033 = vmatprep.mubr.f32.mxu0 0.0
    %1034 = vmatmul.mubr.f32.gmra.mxu0 %v892
    %v1035 = vpop.f32.mrf.mxu0
    %v1036 = vadd.f32 0.0, %v1035
    %v1037 = vpop.f32.mrf.mxu0
    %v1038 = vadd.f32 0.0, %v1037
    %1039 = vdwg.mxu0
    %v1040 = vadd.f32 %v894, %v965
    %v1041 = vadd.f32 %v895, %v967
    %v1042 = vadd.f32 %v896, %v1036
    %v1043 = vadd.f32 %v897, %v1038
    %v1044 = vxor.u32 %v1040, 2147483648
    %v1045 = vmul.f32 %v1044, 1.442695
    %v1046 = vpow.pop %v1045
    %v1047 = vadd.f32 %v1046, 1.0
    %v1048 = vrcp.pop %v1047
    %v1049 = vmul.f32 1.0, %v1048
    %v1050 = vxor.u32 %v1041, 2147483648
    %v1051 = vmul.f32 %v1050, 1.442695
    %v1052 = vpow.pop %v1051
    %v1053 = vadd.f32 %v1052, 1.0
    %v1054 = vrcp.pop %v1053
    %v1055 = vmul.f32 1.0, %v1054
    %v1056 = vxor.u32 %v1042, 2147483648
    %v1057 = vmul.f32 %v1056, 1.442695
    %v1058 = vpow.pop %v1057
    %v1059 = vadd.f32 %v1058, 1.0
    %v1060 = vrcp.pop %v1059
    %v1061 = vmul.f32 1.0, %v1060
    %v1062 = vtanh.pop %v1043
    %v1063 = vmul.f32 %v1055, %v890
    %v1064 = vmul.f32 %v1049, %v1062
    %v1065 = vadd.f32 %v1063, %v1064
    %v1066 = vtanh.pop %v1065
    %v1067 = vmul.f32 %v1061, %v1066
    %1068 = vst [vmem:[#allocation3 + $0x10] sm:$0xff] %v1067
    %v1069 = vld [vmem:[#allocation2 + $0x60] sm:$0xff]
    %v1070 = vld [vmem:[#allocation2 + $0x68] sm:$0xff]
    %v1071 = vld [vmem:[#allocation2 + $0x70] sm:$0xff]
    %v1072 = vld [vmem:[#allocation2 + $0x78] sm:$0xff]
    %1073 = vmatprep.subr.mxu0 %v539
    %1074 = vmatpush1.msra.mxu0 %v538
    %1075 = vmatprep.subr.mxu0 %v535
    %1076 = vmatpush1.msra.mxu0 %v534
    %1077 = vmatprep.subr.mxu0 %v531
    %1078 = vmatpush1.msra.mxu0 %v530
    %1079 = vmatprep.subr.mxu0 %v527
    %1080 = vmatpush1.msra.mxu0 %v526
    %1081 = vmatprep.subr.mxu0 %v523
    %1082 = vmatpush1.msra.mxu0 %v522
    %1083 = vmatprep.subr.mxu0 %v519
    %1084 = vmatpush1.msra.mxu0 %v518
    %1085 = vmatprep.subr.mxu0 %v515
    %1086 = vmatpush1.msra.mxu0 %v514
    %1087 = vmatprep.subr.mxu0 %v511
    %1088 = vmatpush1.msra.mxu0 %v510
    %1089 = vmatprep.subr.mxu0 %v507
    %1090 = vmatpush1.msra.mxu0 %v506
    %1091 = vmatprep.subr.mxu0 %v503
    %1092 = vmatpush1.msra.mxu0 %v502
    %1093 = vmatprep.subr.mxu0 %v499
    %1094 = vmatpush1.msra.mxu0 %v498
    %1095 = vmatprep.subr.mxu0 %v495
    %1096 = vmatpush1.msra.mxu0 %v494
    %1097 = vmatprep.subr.mxu0 %v491
    %1098 = vmatpush1.msra.mxu0 %v490
    %1099 = vmatprep.subr.mxu0 %v487
    %1100 = vmatpush1.msra.mxu0 %v486
    %1101 = vmatprep.subr.mxu0 %v483
    %1102 = vmatpush1.msra.mxu0 %v482
    %1103 = vmatprep.subr.mxu0 %v479
    %1104 = vmatpush1.msra.mxu0 %v478
    %1105 = vmatprep.subr.mxu0 0.0
    %1106 = vmatpush2.msra.mxu0 0.0
    %1107 = vmatprep.subr.mxu0 0.0
    %1108 = vmatpush2.msra.mxu0 0.0
    %1109 = vmatprep.subr.mxu0 0.0
    %1110 = vmatpush2.msra.mxu0 0.0
    %1111 = vmatprep.subr.mxu0 0.0
    %1112 = vmatpush2.msra.mxu0 0.0
    %1113 = vmatprep.subr.mxu0 0.0
    %1114 = vmatpush2.msra.mxu0 0.0
    %1115 = vmatprep.subr.mxu0 0.0
    %1116 = vmatpush2.msra.mxu0 0.0
    %1117 = vmatprep.subr.mxu0 0.0
    %1118 = vmatpush2.msra.mxu0 0.0
    %1119 = vmatprep.subr.mxu0 0.0
    %1120 = vmatpush2.msra.mxu0 0.0
    %1121 = vmatprep.subr.mxu0 0.0
    %1122 = vmatpush2.msra.mxu0 0.0
    %1123 = vmatprep.subr.mxu0 0.0
    %1124 = vmatpush2.msra.mxu0 0.0
    %1125 = vmatprep.subr.mxu0 0.0
    %1126 = vmatpush2.msra.mxu0 0.0
    %1127 = vmatprep.subr.mxu0 0.0
    %1128 = vmatpush2.msra.mxu0 0.0
    %1129 = vmatprep.subr.mxu0 0.0
    %1130 = vmatpush2.msra.mxu0 0.0
    %1131 = vmatprep.subr.mxu0 0.0
    %1132 = vmatpush2.msra.mxu0 0.0
    %1133 = vmatprep.subr.mxu0 0.0
    %1134 = vmatpush2.msra.mxu0 0.0
    %1135 = vmatprep.subr.mxu0 0.0
    %1136 = vmatpush2.msra.mxu0 0.0
    %1137 = vmatprep.mubr.f32.mxu0 0.0
    %1138 = vmatmul.mubr.f32.gmra.mxu0 %v1067
    %v1139 = vpop.f32.mrf.mxu0
    %v1140 = vadd.f32 0.0, %v1139
    %v1141 = vpop.f32.mrf.mxu0
    %v1142 = vadd.f32 0.0, %v1141
    %1143 = vdwg.mxu0
    %1144 = vmatprep.subr.mxu0 %v541
    %1145 = vmatpush1.msra.mxu0 %v540
    %1146 = vmatprep.subr.mxu0 %v537
    %1147 = vmatpush1.msra.mxu0 %v536
    %1148 = vmatprep.subr.mxu0 %v533
    %1149 = vmatpush1.msra.mxu0 %v532
    %1150 = vmatprep.subr.mxu0 %v529
    %1151 = vmatpush1.msra.mxu0 %v528
    %1152 = vmatprep.subr.mxu0 %v525
    %1153 = vmatpush1.msra.mxu0 %v524
    %1154 = vmatprep.subr.mxu0 %v521
    %1155 = vmatpush1.msra.mxu0 %v520
    %1156 = vmatprep.subr.mxu0 %v517
    %1157 = vmatpush1.msra.mxu0 %v516
    %1158 = vmatprep.subr.mxu0 %v513
    %1159 = vmatpush1.msra.mxu0 %v512
    %1160 = vmatprep.subr.mxu0 %v509
    %1161 = vmatpush1.msra.mxu0 %v508
    %1162 = vmatprep.subr.mxu0 %v505
    %1163 = vmatpush1.msra.mxu0 %v504
    %1164 = vmatprep.subr.mxu0 %v501
    %1165 = vmatpush1.msra.mxu0 %v500
    %1166 = vmatprep.subr.mxu0 %v497
    %1167 = vmatpush1.msra.mxu0 %v496
    %1168 = vmatprep.subr.mxu0 %v493
    %1169 = vmatpush1.msra.mxu0 %v492
    %1170 = vmatprep.subr.mxu0 %v489
    %1171 = vmatpush1.msra.mxu0 %v488
    %1172 = vmatprep.subr.mxu0 %v485
    %1173 = vmatpush1.msra.mxu0 %v484
    %1174 = vmatprep.subr.mxu0 %v481
    %1175 = vmatpush1.msra.mxu0 %v480
    %1176 = vmatprep.subr.mxu0 0.0
    %1177 = vmatpush2.msra.mxu0 0.0
    %1178 = vmatprep.subr.mxu0 0.0
    %1179 = vmatpush2.msra.mxu0 0.0
    %1180 = vmatprep.subr.mxu0 0.0
    %1181 = vmatpush2.msra.mxu0 0.0
    %1182 = vmatprep.subr.mxu0 0.0
    %1183 = vmatpush2.msra.mxu0 0.0
    %1184 = vmatprep.subr.mxu0 0.0
    %1185 = vmatpush2.msra.mxu0 0.0
    %1186 = vmatprep.subr.mxu0 0.0
    %1187 = vmatpush2.msra.mxu0 0.0
    %1188 = vmatprep.subr.mxu0 0.0
    %1189 = vmatpush2.msra.mxu0 0.0
    %1190 = vmatprep.subr.mxu0 0.0
    %1191 = vmatpush2.msra.mxu0 0.0
    %1192 = vmatprep.subr.mxu0 0.0
    %1193 = vmatpush2.msra.mxu0 0.0
    %1194 = vmatprep.subr.mxu0 0.0
    %1195 = vmatpush2.msra.mxu0 0.0
    %1196 = vmatprep.subr.mxu0 0.0
    %1197 = vmatpush2.msra.mxu0 0.0
    %1198 = vmatprep.subr.mxu0 0.0
    %1199 = vmatpush2.msra.mxu0 0.0
    %1200 = vmatprep.subr.mxu0 0.0
    %1201 = vmatpush2.msra.mxu0 0.0
    %1202 = vmatprep.subr.mxu0 0.0
    %1203 = vmatpush2.msra.mxu0 0.0
    %1204 = vmatprep.subr.mxu0 0.0
    %1205 = vmatpush2.msra.mxu0 0.0
    %1206 = vmatprep.subr.mxu0 0.0
    %1207 = vmatpush2.msra.mxu0 0.0
    %1208 = vmatprep.mubr.f32.mxu0 0.0
    %1209 = vmatmul.mubr.f32.gmra.mxu0 %v1067
    %v1210 = vpop.f32.mrf.mxu0
    %v1211 = vadd.f32 0.0, %v1210
    %v1212 = vpop.f32.mrf.mxu0
    %v1213 = vadd.f32 0.0, %v1212
    %1214 = vdwg.mxu0
    %v1215 = vadd.f32 %v1069, %v1140
    %v1216 = vadd.f32 %v1070, %v1142
    %v1217 = vadd.f32 %v1071, %v1211
    %v1218 = vadd.f32 %v1072, %v1213
    %v1219 = vxor.u32 %v1215, 2147483648
    %v1220 = vmul.f32 %v1219, 1.442695
    %v1221 = vpow.pop %v1220
    %v1222 = vadd.f32 %v1221, 1.0
    %v1223 = vrcp.pop %v1222
    %v1224 = vmul.f32 1.0, %v1223
    %v1225 = vxor.u32 %v1216, 2147483648
    %v1226 = vmul.f32 %v1225, 1.442695
    %v1227 = vpow.pop %v1226
    %v1228 = vadd.f32 %v1227, 1.0
    %v1229 = vrcp.pop %v1228
    %v1230 = vmul.f32 1.0, %v1229
    %v1231 = vxor.u32 %v1217, 2147483648
    %v1232 = vmul.f32 %v1231, 1.442695
    %v1233 = vpow.pop %v1232
    %v1234 = vadd.f32 %v1233, 1.0
    %v1235 = vrcp.pop %v1234
    %v1236 = vmul.f32 1.0, %v1235
    %v1237 = vtanh.pop %v1218
    %v1238 = vmul.f32 %v1230, %v1065
    %v1239 = vmul.f32 %v1224, %v1237
    %v1240 = vadd.f32 %v1238, %v1239
    %v1241 = vtanh.pop %v1240
    %v1242 = vmul.f32 %v1236, %v1241
    %1243 = vst [vmem:[#allocation3 + $0x18] sm:$0xff] %v1242
    %v1244 = vld [vmem:[#allocation2 + $0x80] sm:$0xff]
    %v1245 = vld [vmem:[#allocation2 + $0x88] sm:$0xff]
    %v1246 = vld [vmem:[#allocation2 + $0x90] sm:$0xff]
    %v1247 = vld [vmem:[#allocation2 + $0x98] sm:$0xff]
    %1248 = vmatprep.subr.mxu0 %v539
    %1249 = vmatpush1.msra.mxu0 %v538
    %1250 = vmatprep.subr.mxu0 %v535
    %1251 = vmatpush1.msra.mxu0 %v534
    %1252 = vmatprep.subr.mxu0 %v531
    %1253 = vmatpush1.msra.mxu0 %v530
    %1254 = vmatprep.subr.mxu0 %v527
    %1255 = vmatpush1.msra.mxu0 %v526
    %1256 = vmatprep.subr.mxu0 %v523
    %1257 = vmatpush1.msra.mxu0 %v522
    %1258 = vmatprep.subr.mxu0 %v519
    %1259 = vmatpush1.msra.mxu0 %v518
    %1260 = vmatprep.subr.mxu0 %v515
    %1261 = vmatpush1.msra.mxu0 %v514
    %1262 = vmatprep.subr.mxu0 %v511
    %1263 = vmatpush1.msra.mxu0 %v510
    %1264 = vmatprep.subr.mxu0 %v507
    %1265 = vmatpush1.msra.mxu0 %v506
    %1266 = vmatprep.subr.mxu0 %v503
    %1267 = vmatpush1.msra.mxu0 %v502
    %1268 = vmatprep.subr.mxu0 %v499
    %1269 = vmatpush1.msra.mxu0 %v498
    %1270 = vmatprep.subr.mxu0 %v495
    %1271 = vmatpush1.msra.mxu0 %v494
    %1272 = vmatprep.subr.mxu0 %v491
    %1273 = vmatpush1.msra.mxu0 %v490
    %1274 = vmatprep.subr.mxu0 %v487
    %1275 = vmatpush1.msra.mxu0 %v486
    %1276 = vmatprep.subr.mxu0 %v483
    %1277 = vmatpush1.msra.mxu0 %v482
    %1278 = vmatprep.subr.mxu0 %v479
    %1279 = vmatpush1.msra.mxu0 %v478
    %1280 = vmatprep.subr.mxu0 0.0
    %1281 = vmatpush2.msra.mxu0 0.0
    %1282 = vmatprep.subr.mxu0 0.0
    %1283 = vmatpush2.msra.mxu0 0.0
    %1284 = vmatprep.subr.mxu0 0.0
    %1285 = vmatpush2.msra.mxu0 0.0
    %1286 = vmatprep.subr.mxu0 0.0
    %1287 = vmatpush2.msra.mxu0 0.0
    %1288 = vmatprep.subr.mxu0 0.0
    %1289 = vmatpush2.msra.mxu0 0.0
    %1290 = vmatprep.subr.mxu0 0.0
    %1291 = vmatpush2.msra.mxu0 0.0
    %1292 = vmatprep.subr.mxu0 0.0
    %1293 = vmatpush2.msra.mxu0 0.0
    %1294 = vmatprep.subr.mxu0 0.0
    %1295 = vmatpush2.msra.mxu0 0.0
    %1296 = vmatprep.subr.mxu0 0.0
    %1297 = vmatpush2.msra.mxu0 0.0
    %1298 = vmatprep.subr.mxu0 0.0
    %1299 = vmatpush2.msra.mxu0 0.0
    %1300 = vmatprep.subr.mxu0 0.0
    %1301 = vmatpush2.msra.mxu0 0.0
    %1302 = vmatprep.subr.mxu0 0.0
    %1303 = vmatpush2.msra.mxu0 0.0
    %1304 = vmatprep.subr.mxu0 0.0
    %1305 = vmatpush2.msra.mxu0 0.0
    %1306 = vmatprep.subr.mxu0 0.0
    %1307 = vmatpush2.msra.mxu0 0.0
    %1308 = vmatprep.subr.mxu0 0.0
    %1309 = vmatpush2.msra.mxu0 0.0
    %1310 = vmatprep.subr.mxu0 0.0
    %1311 = vmatpush2.msra.mxu0 0.0
    %1312 = vmatprep.mubr.f32.mxu0 0.0
    %1313 = vmatmul.mubr.f32.gmra.mxu0 %v1242
    %v1314 = vpop.f32.mrf.mxu0
    %v1315 = vadd.f32 0.0, %v1314
    %v1316 = vpop.f32.mrf.mxu0
    %v1317 = vadd.f32 0.0, %v1316
    %1318 = vdwg.mxu0
    %1319 = vmatprep.subr.mxu0 %v541
    %1320 = vmatpush1.msra.mxu0 %v540
    %1321 = vmatprep.subr.mxu0 %v537
    %1322 = vmatpush1.msra.mxu0 %v536
    %1323 = vmatprep.subr.mxu0 %v533
    %1324 = vmatpush1.msra.mxu0 %v532
    %1325 = vmatprep.subr.mxu0 %v529
    %1326 = vmatpush1.msra.mxu0 %v528
    %1327 = vmatprep.subr.mxu0 %v525
    %1328 = vmatpush1.msra.mxu0 %v524
    %1329 = vmatprep.subr.mxu0 %v521
    %1330 = vmatpush1.msra.mxu0 %v520
    %1331 = vmatprep.subr.mxu0 %v517
    %1332 = vmatpush1.msra.mxu0 %v516
    %1333 = vmatprep.subr.mxu0 %v513
    %1334 = vmatpush1.msra.mxu0 %v512
    %1335 = vmatprep.subr.mxu0 %v509
    %1336 = vmatpush1.msra.mxu0 %v508
    %1337 = vmatprep.subr.mxu0 %v505
    %1338 = vmatpush1.msra.mxu0 %v504
    %1339 = vmatprep.subr.mxu0 %v501
    %1340 = vmatpush1.msra.mxu0 %v500
    %1341 = vmatprep.subr.mxu0 %v497
    %1342 = vmatpush1.msra.mxu0 %v496
    %1343 = vmatprep.subr.mxu0 %v493
    %1344 = vmatpush1.msra.mxu0 %v492
    %1345 = vmatprep.subr.mxu0 %v489
    %1346 = vmatpush1.msra.mxu0 %v488
    %1347 = vmatprep.subr.mxu0 %v485
    %1348 = vmatpush1.msra.mxu0 %v484
    %1349 = vmatprep.subr.mxu0 %v481
    %1350 = vmatpush1.msra.mxu0 %v480
    %1351 = vmatprep.subr.mxu0 0.0
    %1352 = vmatpush2.msra.mxu0 0.0
    %1353 = vmatprep.subr.mxu0 0.0
    %1354 = vmatpush2.msra.mxu0 0.0
    %1355 = vmatprep.subr.mxu0 0.0
    %1356 = vmatpush2.msra.mxu0 0.0
    %1357 = vmatprep.subr.mxu0 0.0
    %1358 = vmatpush2.msra.mxu0 0.0
    %1359 = vmatprep.subr.mxu0 0.0
    %1360 = vmatpush2.msra.mxu0 0.0
    %1361 = vmatprep.subr.mxu0 0.0
    %1362 = vmatpush2.msra.mxu0 0.0
    %1363 = vmatprep.subr.mxu0 0.0
    %1364 = vmatpush2.msra.mxu0 0.0
    %1365 = vmatprep.subr.mxu0 0.0
    %1366 = vmatpush2.msra.mxu0 0.0
    %1367 = vmatprep.subr.mxu0 0.0
    %1368 = vmatpush2.msra.mxu0 0.0
    %1369 = vmatprep.subr.mxu0 0.0
    %1370 = vmatpush2.msra.mxu0 0.0
    %1371 = vmatprep.subr.mxu0 0.0
    %1372 = vmatpush2.msra.mxu0 0.0
    %1373 = vmatprep.subr.mxu0 0.0
    %1374 = vmatpush2.msra.mxu0 0.0
    %1375 = vmatprep.subr.mxu0 0.0
    %1376 = vmatpush2.msra.mxu0 0.0
    %1377 = vmatprep.subr.mxu0 0.0
    %1378 = vmatpush2.msra.mxu0 0.0
    %1379 = vmatprep.subr.mxu0 0.0
    %1380 = vmatpush2.msra.mxu0 0.0
    %1381 = vmatprep.subr.mxu0 0.0
    %1382 = vmatpush2.msra.mxu0 0.0
    %1383 = vmatprep.mubr.f32.mxu0 0.0
    %1384 = vmatmul.mubr.f32.gmra.mxu0 %v1242
    %v1385 = vpop.f32.mrf.mxu0
    %v1386 = vadd.f32 0.0, %v1385
    %v1387 = vpop.f32.mrf.mxu0
    %v1388 = vadd.f32 0.0, %v1387
    %1389 = vdwg.mxu0
    %v1390 = vadd.f32 %v1244, %v1315
    %v1391 = vadd.f32 %v1245, %v1317
    %v1392 = vadd.f32 %v1246, %v1386
    %v1393 = vadd.f32 %v1247, %v1388
    %v1394 = vxor.u32 %v1390, 2147483648
    %v1395 = vmul.f32 %v1394, 1.442695
    %v1396 = vpow.pop %v1395
    %v1397 = vadd.f32 %v1396, 1.0
    %v1398 = vrcp.pop %v1397
    %v1399 = vmul.f32 1.0, %v1398
    %v1400 = vxor.u32 %v1391, 2147483648
    %v1401 = vmul.f32 %v1400, 1.442695
    %v1402 = vpow.pop %v1401
    %v1403 = vadd.f32 %v1402, 1.0
    %v1404 = vrcp.pop %v1403
    %v1405 = vmul.f32 1.0, %v1404
    %v1406 = vxor.u32 %v1392, 2147483648
    %v1407 = vmul.f32 %v1406, 1.442695
    %v1408 = vpow.pop %v1407
    %v1409 = vadd.f32 %v1408, 1.0
    %v1410 = vrcp.pop %v1409
    %v1411 = vmul.f32 1.0, %v1410
    %v1412 = vtanh.pop %v1393
    %v1413 = vmul.f32 %v1405, %v1240
    %v1414 = vmul.f32 %v1399, %v1412
    %v1415 = vadd.f32 %v1413, %v1414
    %v1416 = vtanh.pop %v1415
    %v1417 = vmul.f32 %v1411, %v1416
    %1418 = vst [vmem:[#allocation3 + $0x20] sm:$0xff] %v1417
    %v1419 = vld [vmem:[#allocation2 + $0xa0] sm:$0xff]
    %v1420 = vld [vmem:[#allocation2 + $0xa8] sm:$0xff]
    %v1421 = vld [vmem:[#allocation2 + $0xb0] sm:$0xff]
    %v1422 = vld [vmem:[#allocation2 + $0xb8] sm:$0xff]
    %1423 = vmatprep.subr.mxu0 %v539
    %1424 = vmatpush1.msra.mxu0 %v538
    %1425 = vmatprep.subr.mxu0 %v535
    %1426 = vmatpush1.msra.mxu0 %v534
    %1427 = vmatprep.subr.mxu0 %v531
    %1428 = vmatpush1.msra.mxu0 %v530
    %1429 = vmatprep.subr.mxu0 %v527
    %1430 = vmatpush1.msra.mxu0 %v526
    %1431 = vmatprep.subr.mxu0 %v523
    %1432 = vmatpush1.msra.mxu0 %v522
    %1433 = vmatprep.subr.mxu0 %v519
    %1434 = vmatpush1.msra.mxu0 %v518
    %1435 = vmatprep.subr.mxu0 %v515
    %1436 = vmatpush1.msra.mxu0 %v514
    %1437 = vmatprep.subr.mxu0 %v511
    %1438 = vmatpush1.msra.mxu0 %v510
    %1439 = vmatprep.subr.mxu0 %v507
    %1440 = vmatpush1.msra.mxu0 %v506
    %1441 = vmatprep.subr.mxu0 %v503
    %1442 = vmatpush1.msra.mxu0 %v502
    %1443 = vmatprep.subr.mxu0 %v499
    %1444 = vmatpush1.msra.mxu0 %v498
    %1445 = vmatprep.subr.mxu0 %v495
    %1446 = vmatpush1.msra.mxu0 %v494
    %1447 = vmatprep.subr.mxu0 %v491
    %1448 = vmatpush1.msra.mxu0 %v490
    %1449 = vmatprep.subr.mxu0 %v487
    %1450 = vmatpush1.msra.mxu0 %v486
    %1451 = vmatprep.subr.mxu0 %v483
    %1452 = vmatpush1.msra.mxu0 %v482
    %1453 = vmatprep.subr.mxu0 %v479
    %1454 = vmatpush1.msra.mxu0 %v478
    %1455 = vmatprep.subr.mxu0 0.0
    %1456 = vmatpush2.msra.mxu0 0.0
    %1457 = vmatprep.subr.mxu0 0.0
    %1458 = vmatpush2.msra.mxu0 0.0
    %1459 = vmatprep.subr.mxu0 0.0
    %1460 = vmatpush2.msra.mxu0 0.0
    %1461 = vmatprep.subr.mxu0 0.0
    %1462 = vmatpush2.msra.mxu0 0.0
    %1463 = vmatprep.subr.mxu0 0.0
    %1464 = vmatpush2.msra.mxu0 0.0
    %1465 = vmatprep.subr.mxu0 0.0
    %1466 = vmatpush2.msra.mxu0 0.0
    %1467 = vmatprep.subr.mxu0 0.0
    %1468 = vmatpush2.msra.mxu0 0.0
    %1469 = vmatprep.subr.mxu0 0.0
    %1470 = vmatpush2.msra.mxu0 0.0
    %1471 = vmatprep.subr.mxu0 0.0
    %1472 = vmatpush2.msra.mxu0 0.0
    %1473 = vmatprep.subr.mxu0 0.0
    %1474 = vmatpush2.msra.mxu0 0.0
    %1475 = vmatprep.subr.mxu0 0.0
    %1476 = vmatpush2.msra.mxu0 0.0
    %1477 = vmatprep.subr.mxu0 0.0
    %1478 = vmatpush2.msra.mxu0 0.0
    %1479 = vmatprep.subr.mxu0 0.0
    %1480 = vmatpush2.msra.mxu0 0.0
    %1481 = vmatprep.subr.mxu0 0.0
    %1482 = vmatpush2.msra.mxu0 0.0
    %1483 = vmatprep.subr.mxu0 0.0
    %1484 = vmatpush2.msra.mxu0 0.0
    %1485 = vmatprep.subr.mxu0 0.0
    %1486 = vmatpush2.msra.mxu0 0.0
    %1487 = vmatprep.mubr.f32.mxu0 0.0
    %1488 = vmatmul.mubr.f32.gmra.mxu0 %v1417
    %v1489 = vpop.f32.mrf.mxu0
    %v1490 = vadd.f32 0.0, %v1489
    %v1491 = vpop.f32.mrf.mxu0
    %v1492 = vadd.f32 0.0, %v1491
    %1493 = vdwg.mxu0
    %1494 = vmatprep.subr.mxu0 %v541
    %1495 = vmatpush1.msra.mxu0 %v540
    %1496 = vmatprep.subr.mxu0 %v537
    %1497 = vmatpush1.msra.mxu0 %v536
    %1498 = vmatprep.subr.mxu0 %v533
    %1499 = vmatpush1.msra.mxu0 %v532
    %1500 = vmatprep.subr.mxu0 %v529
    %1501 = vmatpush1.msra.mxu0 %v528
    %1502 = vmatprep.subr.mxu0 %v525
    %1503 = vmatpush1.msra.mxu0 %v524
    %1504 = vmatprep.subr.mxu0 %v521
    %1505 = vmatpush1.msra.mxu0 %v520
    %1506 = vmatprep.subr.mxu0 %v517
    %1507 = vmatpush1.msra.mxu0 %v516
    %1508 = vmatprep.subr.mxu0 %v513
    %1509 = vmatpush1.msra.mxu0 %v512
    %1510 = vmatprep.subr.mxu0 %v509
    %1511 = vmatpush1.msra.mxu0 %v508
    %1512 = vmatprep.subr.mxu0 %v505
    %1513 = vmatpush1.msra.mxu0 %v504
    %1514 = vmatprep.subr.mxu0 %v501
    %1515 = vmatpush1.msra.mxu0 %v500
    %1516 = vmatprep.subr.mxu0 %v497
    %1517 = vmatpush1.msra.mxu0 %v496
    %1518 = vmatprep.subr.mxu0 %v493
    %1519 = vmatpush1.msra.mxu0 %v492
    %1520 = vmatprep.subr.mxu0 %v489
    %1521 = vmatpush1.msra.mxu0 %v488
    %1522 = vmatprep.subr.mxu0 %v485
    %1523 = vmatpush1.msra.mxu0 %v484
    %1524 = vmatprep.subr.mxu0 %v481
    %1525 = vmatpush1.msra.mxu0 %v480
    %1526 = vmatprep.subr.mxu0 0.0
    %1527 = vmatpush2.msra.mxu0 0.0
    %1528 = vmatprep.subr.mxu0 0.0
    %1529 = vmatpush2.msra.mxu0 0.0
    %1530 = vmatprep.subr.mxu0 0.0
    %1531 = vmatpush2.msra.mxu0 0.0
    %1532 = vmatprep.subr.mxu0 0.0
    %1533 = vmatpush2.msra.mxu0 0.0
    %1534 = vmatprep.subr.mxu0 0.0
    %1535 = vmatpush2.msra.mxu0 0.0
    %1536 = vmatprep.subr.mxu0 0.0
    %1537 = vmatpush2.msra.mxu0 0.0
    %1538 = vmatprep.subr.mxu0 0.0
    %1539 = vmatpush2.msra.mxu0 0.0
    %1540 = vmatprep.subr.mxu0 0.0
    %1541 = vmatpush2.msra.mxu0 0.0
    %1542 = vmatprep.subr.mxu0 0.0
    %1543 = vmatpush2.msra.mxu0 0.0
    %1544 = vmatprep.subr.mxu0 0.0
    %1545 = vmatpush2.msra.mxu0 0.0
    %1546 = vmatprep.subr.mxu0 0.0
    %1547 = vmatpush2.msra.mxu0 0.0
    %1548 = vmatprep.subr.mxu0 0.0
    %1549 = vmatpush2.msra.mxu0 0.0
    %1550 = vmatprep.subr.mxu0 0.0
    %1551 = vmatpush2.msra.mxu0 0.0
    %1552 = vmatprep.subr.mxu0 0.0
    %1553 = vmatpush2.msra.mxu0 0.0
    %1554 = vmatprep.subr.mxu0 0.0
    %1555 = vmatpush2.msra.mxu0 0.0
    %1556 = vmatprep.subr.mxu0 0.0
    %1557 = vmatpush2.msra.mxu0 0.0
    %1558 = vmatprep.mubr.f32.mxu0 0.0
    %1559 = vmatmul.mubr.f32.gmra.mxu0 %v1417
    %v1560 = vpop.f32.mrf.mxu0
    %v1561 = vadd.f32 0.0, %v1560
    %v1562 = vpop.f32.mrf.mxu0
    %v1563 = vadd.f32 0.0, %v1562
    %1564 = vdwg.mxu0
    %v1565 = vadd.f32 %v1419, %v1490
    %v1566 = vadd.f32 %v1420, %v1492
    %v1567 = vadd.f32 %v1421, %v1561
    %v1568 = vadd.f32 %v1422, %v1563
    %v1569 = vxor.u32 %v1565, 2147483648
    %v1570 = vmul.f32 %v1569, 1.442695
    %v1571 = vpow.pop %v1570
    %v1572 = vadd.f32 %v1571, 1.0
    %v1573 = vrcp.pop %v1572
    %v1574 = vmul.f32 1.0, %v1573
    %v1575 = vxor.u32 %v1566, 2147483648
    %v1576 = vmul.f32 %v1575, 1.442695
    %v1577 = vpow.pop %v1576
    %v1578 = vadd.f32 %v1577, 1.0
    %v1579 = vrcp.pop %v1578
    %v1580 = vmul.f32 1.0, %v1579
    %v1581 = vxor.u32 %v1567, 2147483648
    %v1582 = vmul.f32 %v1581, 1.442695
    %v1583 = vpow.pop %v1582
    %v1584 = vadd.f32 %v1583, 1.0
    %v1585 = vrcp.pop %v1584
    %v1586 = vmul.f32 1.0, %v1585
    %v1587 = vtanh.pop %v1568
    %v1588 = vmul.f32 %v1580, %v1415
    %v1589 = vmul.f32 %v1574, %v1587
    %v1590 = vadd.f32 %v1588, %v1589
    %v1591 = vtanh.pop %v1590
    %v1592 = vmul.f32 %v1586, %v1591
    %1593 = vst [vmem:[#allocation3 + $0x28] sm:$0xff] %v1592
    %v1594 = vld [vmem:[#allocation2 + $0xc0] sm:$0xff]
    %v1595 = vld [vmem:[#allocation2 + $0xc8] sm:$0xff]
    %v1596 = vld [vmem:[#allocation2 + $0xd0] sm:$0xff]
    %v1597 = vld [vmem:[#allocation2 + $0xd8] sm:$0xff]
    %1598 = vmatprep.subr.mxu0 %v539
    %1599 = vmatpush1.msra.mxu0 %v538
    %1600 = vmatprep.subr.mxu0 %v535
    %1601 = vmatpush1.msra.mxu0 %v534
    %1602 = vmatprep.subr.mxu0 %v531
    %1603 = vmatpush1.msra.mxu0 %v530
    %1604 = vmatprep.subr.mxu0 %v527
    %1605 = vmatpush1.msra.mxu0 %v526
    %1606 = vmatprep.subr.mxu0 %v523
    %1607 = vmatpush1.msra.mxu0 %v522
    %1608 = vmatprep.subr.mxu0 %v519
    %1609 = vmatpush1.msra.mxu0 %v518
    %1610 = vmatprep.subr.mxu0 %v515
    %1611 = vmatpush1.msra.mxu0 %v514
    %1612 = vmatprep.subr.mxu0 %v511
    %1613 = vmatpush1.msra.mxu0 %v510
    %1614 = vmatprep.subr.mxu0 %v507
    %1615 = vmatpush1.msra.mxu0 %v506
    %1616 = vmatprep.subr.mxu0 %v503
    %1617 = vmatpush1.msra.mxu0 %v502
    %1618 = vmatprep.subr.mxu0 %v499
    %1619 = vmatpush1.msra.mxu0 %v498
    %1620 = vmatprep.subr.mxu0 %v495
    %1621 = vmatpush1.msra.mxu0 %v494
    %1622 = vmatprep.subr.mxu0 %v491
    %1623 = vmatpush1.msra.mxu0 %v490
    %1624 = vmatprep.subr.mxu0 %v487
    %1625 = vmatpush1.msra.mxu0 %v486
    %1626 = vmatprep.subr.mxu0 %v483
    %1627 = vmatpush1.msra.mxu0 %v482
    %1628 = vmatprep.subr.mxu0 %v479
    %1629 = vmatpush1.msra.mxu0 %v478
    %1630 = vmatprep.subr.mxu0 0.0
    %1631 = vmatpush2.msra.mxu0 0.0
    %1632 = vmatprep.subr.mxu0 0.0
    %1633 = vmatpush2.msra.mxu0 0.0
    %1634 = vmatprep.subr.mxu0 0.0
    %1635 = vmatpush2.msra.mxu0 0.0
    %1636 = vmatprep.subr.mxu0 0.0
    %1637 = vmatpush2.msra.mxu0 0.0
    %1638 = vmatprep.subr.mxu0 0.0
    %1639 = vmatpush2.msra.mxu0 0.0
    %1640 = vmatprep.subr.mxu0 0.0
    %1641 = vmatpush2.msra.mxu0 0.0
    %1642 = vmatprep.subr.mxu0 0.0
    %1643 = vmatpush2.msra.mxu0 0.0
    %1644 = vmatprep.subr.mxu0 0.0
    %1645 = vmatpush2.msra.mxu0 0.0
    %1646 = vmatprep.subr.mxu0 0.0
    %1647 = vmatpush2.msra.mxu0 0.0
    %1648 = vmatprep.subr.mxu0 0.0
    %1649 = vmatpush2.msra.mxu0 0.0
    %1650 = vmatprep.subr.mxu0 0.0
    %1651 = vmatpush2.msra.mxu0 0.0
    %1652 = vmatprep.subr.mxu0 0.0
    %1653 = vmatpush2.msra.mxu0 0.0
    %1654 = vmatprep.subr.mxu0 0.0
    %1655 = vmatpush2.msra.mxu0 0.0
    %1656 = vmatprep.subr.mxu0 0.0
    %1657 = vmatpush2.msra.mxu0 0.0
    %1658 = vmatprep.subr.mxu0 0.0
    %1659 = vmatpush2.msra.mxu0 0.0
    %1660 = vmatprep.subr.mxu0 0.0
    %1661 = vmatpush2.msra.mxu0 0.0
    %1662 = vmatprep.mubr.f32.mxu0 0.0
    %1663 = vmatmul.mubr.f32.gmra.mxu0 %v1592
    %v1664 = vpop.f32.mrf.mxu0
    %v1665 = vadd.f32 0.0, %v1664
    %v1666 = vpop.f32.mrf.mxu0
    %v1667 = vadd.f32 0.0, %v1666
    %1668 = vdwg.mxu0
    %1669 = vmatprep.subr.mxu0 %v541
    %1670 = vmatpush1.msra.mxu0 %v540
    %1671 = vmatprep.subr.mxu0 %v537
    %1672 = vmatpush1.msra.mxu0 %v536
    %1673 = vmatprep.subr.mxu0 %v533
    %1674 = vmatpush1.msra.mxu0 %v532
    %1675 = vmatprep.subr.mxu0 %v529
    %1676 = vmatpush1.msra.mxu0 %v528
    %1677 = vmatprep.subr.mxu0 %v525
    %1678 = vmatpush1.msra.mxu0 %v524
    %1679 = vmatprep.subr.mxu0 %v521
    %1680 = vmatpush1.msra.mxu0 %v520
    %1681 = vmatprep.subr.mxu0 %v517
    %1682 = vmatpush1.msra.mxu0 %v516
    %1683 = vmatprep.subr.mxu0 %v513
    %1684 = vmatpush1.msra.mxu0 %v512
    %1685 = vmatprep.subr.mxu0 %v509
    %1686 = vmatpush1.msra.mxu0 %v508
    %1687 = vmatprep.subr.mxu0 %v505
    %1688 = vmatpush1.msra.mxu0 %v504
    %1689 = vmatprep.subr.mxu0 %v501
    %1690 = vmatpush1.msra.mxu0 %v500
    %1691 = vmatprep.subr.mxu0 %v497
    %1692 = vmatpush1.msra.mxu0 %v496
    %1693 = vmatprep.subr.mxu0 %v493
    %1694 = vmatpush1.msra.mxu0 %v492
    %1695 = vmatprep.subr.mxu0 %v489
    %1696 = vmatpush1.msra.mxu0 %v488
    %1697 = vmatprep.subr.mxu0 %v485
    %1698 = vmatpush1.msra.mxu0 %v484
    %1699 = vmatprep.subr.mxu0 %v481
    %1700 = vmatpush1.msra.mxu0 %v480
    %1701 = vmatprep.subr.mxu0 0.0
    %1702 = vmatpush2.msra.mxu0 0.0
    %1703 = vmatprep.subr.mxu0 0.0
    %1704 = vmatpush2.msra.mxu0 0.0
    %1705 = vmatprep.subr.mxu0 0.0
    %1706 = vmatpush2.msra.mxu0 0.0
    %1707 = vmatprep.subr.mxu0 0.0
    %1708 = vmatpush2.msra.mxu0 0.0
    %1709 = vmatprep.subr.mxu0 0.0
    %1710 = vmatpush2.msra.mxu0 0.0
    %1711 = vmatprep.subr.mxu0 0.0
    %1712 = vmatpush2.msra.mxu0 0.0
    %1713 = vmatprep.subr.mxu0 0.0
    %1714 = vmatpush2.msra.mxu0 0.0
    %1715 = vmatprep.subr.mxu0 0.0
    %1716 = vmatpush2.msra.mxu0 0.0
    %1717 = vmatprep.subr.mxu0 0.0
    %1718 = vmatpush2.msra.mxu0 0.0
    %1719 = vmatprep.subr.mxu0 0.0
    %1720 = vmatpush2.msra.mxu0 0.0
    %1721 = vmatprep.subr.mxu0 0.0
    %1722 = vmatpush2.msra.mxu0 0.0
    %1723 = vmatprep.subr.mxu0 0.0
    %1724 = vmatpush2.msra.mxu0 0.0
    %1725 = vmatprep.subr.mxu0 0.0
    %1726 = vmatpush2.msra.mxu0 0.0
    %1727 = vmatprep.subr.mxu0 0.0
    %1728 = vmatpush2.msra.mxu0 0.0
    %1729 = vmatprep.subr.mxu0 0.0
    %1730 = vmatpush2.msra.mxu0 0.0
    %1731 = vmatprep.subr.mxu0 0.0
    %1732 = vmatpush2.msra.mxu0 0.0
    %1733 = vmatprep.mubr.f32.mxu0 0.0
    %1734 = vmatmul.mubr.f32.gmra.mxu0 %v1592
    %v1735 = vpop.f32.mrf.mxu0
    %v1736 = vadd.f32 0.0, %v1735
    %v1737 = vpop.f32.mrf.mxu0
    %v1738 = vadd.f32 0.0, %v1737
    %1739 = vdwg.mxu0
    %v1740 = vadd.f32 %v1594, %v1665
    %v1741 = vadd.f32 %v1595, %v1667
    %v1742 = vadd.f32 %v1596, %v1736
    %v1743 = vadd.f32 %v1597, %v1738
    %v1744 = vxor.u32 %v1740, 2147483648
    %v1745 = vmul.f32 %v1744, 1.442695
    %v1746 = vpow.pop %v1745
    %v1747 = vadd.f32 %v1746, 1.0
    %v1748 = vrcp.pop %v1747
    %v1749 = vmul.f32 1.0, %v1748
    %v1750 = vxor.u32 %v1741, 2147483648
    %v1751 = vmul.f32 %v1750, 1.442695
    %v1752 = vpow.pop %v1751
    %v1753 = vadd.f32 %v1752, 1.0
    %v1754 = vrcp.pop %v1753
    %v1755 = vmul.f32 1.0, %v1754
    %v1756 = vxor.u32 %v1742, 2147483648
    %v1757 = vmul.f32 %v1756, 1.442695
    %v1758 = vpow.pop %v1757
    %v1759 = vadd.f32 %v1758, 1.0
    %v1760 = vrcp.pop %v1759
    %v1761 = vmul.f32 1.0, %v1760
    %v1762 = vtanh.pop %v1743
    %v1763 = vmul.f32 %v1755, %v1590
    %v1764 = vmul.f32 %v1749, %v1762
    %v1765 = vadd.f32 %v1763, %v1764
    %v1766 = vtanh.pop %v1765
    %v1767 = vmul.f32 %v1761, %v1766
    %1768 = vst [vmem:[#allocation3 + $0x30] sm:$0xff] %v1767
    %v1769 = vld [vmem:[#allocation2 + $0xe0] sm:$0xff]
    %v1770 = vld [vmem:[#allocation2 + $0xe8] sm:$0xff]
    %v1771 = vld [vmem:[#allocation2 + $0xf0] sm:$0xff]
    %v1772 = vld [vmem:[#allocation2 + $0xf8] sm:$0xff]
    %1773 = vmatprep.subr.mxu0 %v539
    %1774 = vmatpush1.msra.mxu0 %v538
    %1775 = vmatprep.subr.mxu0 %v535
    %1776 = vmatpush1.msra.mxu0 %v534
    %1777 = vmatprep.subr.mxu0 %v531
    %1778 = vmatpush1.msra.mxu0 %v530
    %1779 = vmatprep.subr.mxu0 %v527
    %1780 = vmatpush1.msra.mxu0 %v526
    %1781 = vmatprep.subr.mxu0 %v523
    %1782 = vmatpush1.msra.mxu0 %v522
    %1783 = vmatprep.subr.mxu0 %v519
    %1784 = vmatpush1.msra.mxu0 %v518
    %1785 = vmatprep.subr.mxu0 %v515
    %1786 = vmatpush1.msra.mxu0 %v514
    %1787 = vmatprep.subr.mxu0 %v511
    %1788 = vmatpush1.msra.mxu0 %v510
    %1789 = vmatprep.subr.mxu0 %v507
    %1790 = vmatpush1.msra.mxu0 %v506
    %1791 = vmatprep.subr.mxu0 %v503
    %1792 = vmatpush1.msra.mxu0 %v502
    %1793 = vmatprep.subr.mxu0 %v499
    %1794 = vmatpush1.msra.mxu0 %v498
    %1795 = vmatprep.subr.mxu0 %v495
    %1796 = vmatpush1.msra.mxu0 %v494
    %1797 = vmatprep.subr.mxu0 %v491
    %1798 = vmatpush1.msra.mxu0 %v490
    %1799 = vmatprep.subr.mxu0 %v487
    %1800 = vmatpush1.msra.mxu0 %v486
    %1801 = vmatprep.subr.mxu0 %v483
    %1802 = vmatpush1.msra.mxu0 %v482
    %1803 = vmatprep.subr.mxu0 %v479
    %1804 = vmatpush1.msra.mxu0 %v478
    %1805 = vmatprep.subr.mxu0 0.0
    %1806 = vmatpush2.msra.mxu0 0.0
    %1807 = vmatprep.subr.mxu0 0.0
    %1808 = vmatpush2.msra.mxu0 0.0
    %1809 = vmatprep.subr.mxu0 0.0
    %1810 = vmatpush2.msra.mxu0 0.0
    %1811 = vmatprep.subr.mxu0 0.0
    %1812 = vmatpush2.msra.mxu0 0.0
    %1813 = vmatprep.subr.mxu0 0.0
    %1814 = vmatpush2.msra.mxu0 0.0
    %1815 = vmatprep.subr.mxu0 0.0
    %1816 = vmatpush2.msra.mxu0 0.0
    %1817 = vmatprep.subr.mxu0 0.0
    %1818 = vmatpush2.msra.mxu0 0.0
    %1819 = vmatprep.subr.mxu0 0.0
    %1820 = vmatpush2.msra.mxu0 0.0
    %1821 = vmatprep.subr.mxu0 0.0
    %1822 = vmatpush2.msra.mxu0 0.0
    %1823 = vmatprep.subr.mxu0 0.0
    %1824 = vmatpush2.msra.mxu0 0.0
    %1825 = vmatprep.subr.mxu0 0.0
    %1826 = vmatpush2.msra.mxu0 0.0
    %1827 = vmatprep.subr.mxu0 0.0
    %1828 = vmatpush2.msra.mxu0 0.0
    %1829 = vmatprep.subr.mxu0 0.0
    %1830 = vmatpush2.msra.mxu0 0.0
    %1831 = vmatprep.subr.mxu0 0.0
    %1832 = vmatpush2.msra.mxu0 0.0
    %1833 = vmatprep.subr.mxu0 0.0
    %1834 = vmatpush2.msra.mxu0 0.0
    %1835 = vmatprep.subr.mxu0 0.0
    %1836 = vmatpush2.msra.mxu0 0.0
    %1837 = vmatprep.mubr.f32.mxu0 0.0
    %1838 = vmatmul.mubr.f32.gmra.mxu0 %v1767
    %v1839 = vpop.f32.mrf.mxu0
    %v1840 = vadd.f32 0.0, %v1839
    %v1841 = vpop.f32.mrf.mxu0
    %v1842 = vadd.f32 0.0, %v1841
    %1843 = vdwg.mxu0
    %1844 = vmatprep.subr.mxu0 %v541
    %1845 = vmatpush1.msra.mxu0 %v540
    %1846 = vmatprep.subr.mxu0 %v537
    %1847 = vmatpush1.msra.mxu0 %v536
    %1848 = vmatprep.subr.mxu0 %v533
    %1849 = vmatpush1.msra.mxu0 %v532
    %1850 = vmatprep.subr.mxu0 %v529
    %1851 = vmatpush1.msra.mxu0 %v528
    %1852 = vmatprep.subr.mxu0 %v525
    %1853 = vmatpush1.msra.mxu0 %v524
    %1854 = vmatprep.subr.mxu0 %v521
    %1855 = vmatpush1.msra.mxu0 %v520
    %1856 = vmatprep.subr.mxu0 %v517
    %1857 = vmatpush1.msra.mxu0 %v516
    %1858 = vmatprep.subr.mxu0 %v513
    %1859 = vmatpush1.msra.mxu0 %v512
    %1860 = vmatprep.subr.mxu0 %v509
    %1861 = vmatpush1.msra.mxu0 %v508
    %1862 = vmatprep.subr.mxu0 %v505
    %1863 = vmatpush1.msra.mxu0 %v504
    %1864 = vmatprep.subr.mxu0 %v501
    %1865 = vmatpush1.msra.mxu0 %v500
    %1866 = vmatprep.subr.mxu0 %v497
    %1867 = vmatpush1.msra.mxu0 %v496
    %1868 = vmatprep.subr.mxu0 %v493
    %1869 = vmatpush1.msra.mxu0 %v492
    %1870 = vmatprep.subr.mxu0 %v489
    %1871 = vmatpush1.msra.mxu0 %v488
    %1872 = vmatprep.subr.mxu0 %v485
    %1873 = vmatpush1.msra.mxu0 %v484
    %1874 = vmatprep.subr.mxu0 %v481
    %1875 = vmatpush1.msra.mxu0 %v480
    %1876 = vmatprep.subr.mxu0 0.0
    %1877 = vmatpush2.msra.mxu0 0.0
    %1878 = vmatprep.subr.mxu0 0.0
    %1879 = vmatpush2.msra.mxu0 0.0
    %1880 = vmatprep.subr.mxu0 0.0
    %1881 = vmatpush2.msra.mxu0 0.0
    %1882 = vmatprep.subr.mxu0 0.0
    %1883 = vmatpush2.msra.mxu0 0.0
    %1884 = vmatprep.subr.mxu0 0.0
    %1885 = vmatpush2.msra.mxu0 0.0
    %1886 = vmatprep.subr.mxu0 0.0
    %1887 = vmatpush2.msra.mxu0 0.0
    %1888 = vmatprep.subr.mxu0 0.0
    %1889 = vmatpush2.msra.mxu0 0.0
    %1890 = vmatprep.subr.mxu0 0.0
    %1891 = vmatpush2.msra.mxu0 0.0
    %1892 = vmatprep.subr.mxu0 0.0
    %1893 = vmatpush2.msra.mxu0 0.0
    %1894 = vmatprep.subr.mxu0 0.0
    %1895 = vmatpush2.msra.mxu0 0.0
    %1896 = vmatprep.subr.mxu0 0.0
    %1897 = vmatpush2.msra.mxu0 0.0
    %1898 = vmatprep.subr.mxu0 0.0
    %1899 = vmatpush2.msra.mxu0 0.0
    %1900 = vmatprep.subr.mxu0 0.0
    %1901 = vmatpush2.msra.mxu0 0.0
    %1902 = vmatprep.subr.mxu0 0.0
    %1903 = vmatpush2.msra.mxu0 0.0
    %1904 = vmatprep.subr.mxu0 0.0
    %1905 = vmatpush2.msra.mxu0 0.0
    %1906 = vmatprep.subr.mxu0 0.0
    %1907 = vmatpush2.msra.mxu0 0.0
    %1908 = vmatprep.mubr.f32.mxu0 0.0
    %1909 = vmatmul.mubr.f32.gmra.mxu0 %v1767
    %v1910 = vpop.f32.mrf.mxu0
    %v1911 = vadd.f32 0.0, %v1910
    %v1912 = vpop.f32.mrf.mxu0
    %v1913 = vadd.f32 0.0, %v1912
    %1914 = vdwg.mxu0
    %v1915 = vadd.f32 %v1769, %v1840
    %v1916 = vadd.f32 %v1770, %v1842
    %v1917 = vadd.f32 %v1771, %v1911
    %v1918 = vadd.f32 %v1772, %v1913
    %v1919 = vxor.u32 %v1915, 2147483648
    %v1920 = vmul.f32 %v1919, 1.442695
    %v1921 = vpow.pop %v1920
    %v1922 = vadd.f32 %v1921, 1.0
    %v1923 = vrcp.pop %v1922
    %v1924 = vmul.f32 1.0, %v1923
    %v1925 = vxor.u32 %v1916, 2147483648
    %v1926 = vmul.f32 %v1925, 1.442695
    %v1927 = vpow.pop %v1926
    %v1928 = vadd.f32 %v1927, 1.0
    %v1929 = vrcp.pop %v1928
    %v1930 = vmul.f32 1.0, %v1929
    %v1931 = vxor.u32 %v1917, 2147483648
    %v1932 = vmul.f32 %v1931, 1.442695
    %v1933 = vpow.pop %v1932
    %v1934 = vadd.f32 %v1933, 1.0
    %v1935 = vrcp.pop %v1934
    %v1936 = vmul.f32 1.0, %v1935
    %v1937 = vtanh.pop %v1918
    %v1938 = vmul.f32 %v1930, %v1765
    %v1939 = vmul.f32 %v1924, %v1937
    %v1940 = vadd.f32 %v1938, %v1939
    %v1941 = vtanh.pop %v1940
    %v1942 = vmul.f32 %v1936, %v1941
    %1943 = vst [vmem:[#allocation3 + $0x38] sm:$0xff] %v1942
    %v1944 = vld [vmem:[#allocation3] sm:$0xff]
    %v1945 = vld [vmem:[#allocation3 + $0x8] sm:$0xff]
    %v1946 = vld [vmem:[#allocation3 + $0x10] sm:$0xff]
    %v1947 = vld [vmem:[#allocation3 + $0x18] sm:$0xff]
    %v1948 = vld [vmem:[#allocation3 + $0x20] sm:$0xff]
    %v1949 = vld [vmem:[#allocation3 + $0x28] sm:$0xff]
    %v1950 = vld [vmem:[#allocation3 + $0x30] sm:$0xff]
    %v1951 = vld [vmem:[#allocation3 + $0x38] sm:$0xff]
    %v1952 = vld [vmem:[#allocation10] sm:$0xff]
    %v1953 = vld [vmem:[#allocation10 + $0x8] sm:$0xff]
    %v1954 = vld [vmem:[#allocation10 + $0x10] sm:$0xff]
    %v1955 = vld [vmem:[#allocation10 + $0x18] sm:$0xff]
    %v1956 = vld [vmem:[#allocation10 + $0x20] sm:$0xff]
    %v1957 = vld [vmem:[#allocation10 + $0x28] sm:$0xff]
    %v1958 = vld [vmem:[#allocation10 + $0x30] sm:$0xff]
    %v1959 = vld [vmem:[#allocation10 + $0x38] sm:$0xff]
    %v1960 = vld [vmem:[#allocation10 + $0x40] sm:$0xff]
    %v1961 = vld [vmem:[#allocation10 + $0x48] sm:$0xff]
    %v1962 = vld [vmem:[#allocation10 + $0x50] sm:$0xff]
    %v1963 = vld [vmem:[#allocation10 + $0x58] sm:$0xff]
    %v1964 = vld [vmem:[#allocation10 + $0x60] sm:$0xff]
    %v1965 = vld [vmem:[#allocation10 + $0x68] sm:$0xff]
    %v1966 = vld [vmem:[#allocation10 + $0x70] sm:$0xff]
    %v1967 = vld [vmem:[#allocation10 + $0x78] sm:$0xff]
    %s1968 = sld [smem:[#allocation4]]
    %v1969 = vstv %s1968
    %1970 = vmatprep.subr.mxu0 0.0
    %1971 = vmatpush1.msra.mxu0 %v1967
    %1972 = vmatprep.subr.mxu0 0.0
    %1973 = vmatpush1.msra.mxu0 %v1966
    %1974 = vmatprep.subr.mxu0 0.0
    %1975 = vmatpush1.msra.mxu0 %v1965
    %1976 = vmatprep.subr.mxu0 0.0
    %1977 = vmatpush1.msra.mxu0 %v1964
    %1978 = vmatprep.subr.mxu0 0.0
    %1979 = vmatpush1.msra.mxu0 %v1963
    %1980 = vmatprep.subr.mxu0 0.0
    %1981 = vmatpush1.msra.mxu0 %v1962
    %1982 = vmatprep.subr.mxu0 0.0
    %1983 = vmatpush1.msra.mxu0 %v1961
    %1984 = vmatprep.subr.mxu0 0.0
    %1985 = vmatpush1.msra.mxu0 %v1960
    %1986 = vmatprep.subr.mxu0 0.0
    %1987 = vmatpush1.msra.mxu0 %v1959
    %1988 = vmatprep.subr.mxu0 0.0
    %1989 = vmatpush1.msra.mxu0 %v1958
    %1990 = vmatprep.subr.mxu0 0.0
    %1991 = vmatpush1.msra.mxu0 %v1957
    %1992 = vmatprep.subr.mxu0 0.0
    %1993 = vmatpush1.msra.mxu0 %v1956
    %1994 = vmatprep.subr.mxu0 0.0
    %1995 = vmatpush1.msra.mxu0 %v1955
    %1996 = vmatprep.subr.mxu0 0.0
    %1997 = vmatpush1.msra.mxu0 %v1954
    %1998 = vmatprep.subr.mxu0 0.0
    %1999 = vmatpush1.msra.mxu0 %v1953
    %2000 = vmatprep.subr.mxu0 0.0
    %2001 = vmatpush1.msra.mxu0 %v1952
    %2002 = vmatprep.subr.mxu0 0.0
    %2003 = vmatpush2.msra.mxu0 0.0
    %2004 = vmatprep.subr.mxu0 0.0
    %2005 = vmatpush2.msra.mxu0 0.0
    %2006 = vmatprep.subr.mxu0 0.0
    %2007 = vmatpush2.msra.mxu0 0.0
    %2008 = vmatprep.subr.mxu0 0.0
    %2009 = vmatpush2.msra.mxu0 0.0
    %2010 = vmatprep.subr.mxu0 0.0
    %2011 = vmatpush2.msra.mxu0 0.0
    %2012 = vmatprep.subr.mxu0 0.0
    %2013 = vmatpush2.msra.mxu0 0.0
    %2014 = vmatprep.subr.mxu0 0.0
    %2015 = vmatpush2.msra.mxu0 0.0
    %2016 = vmatprep.subr.mxu0 0.0
    %2017 = vmatpush2.msra.mxu0 0.0
    %2018 = vmatprep.subr.mxu0 0.0
    %2019 = vmatpush2.msra.mxu0 0.0
    %2020 = vmatprep.subr.mxu0 0.0
    %2021 = vmatpush2.msra.mxu0 0.0
    %2022 = vmatprep.subr.mxu0 0.0
    %2023 = vmatpush2.msra.mxu0 0.0
    %2024 = vmatprep.subr.mxu0 0.0
    %2025 = vmatpush2.msra.mxu0 0.0
    %2026 = vmatprep.subr.mxu0 0.0
    %2027 = vmatpush2.msra.mxu0 0.0
    %2028 = vmatprep.subr.mxu0 0.0
    %2029 = vmatpush2.msra.mxu0 0.0
    %2030 = vmatprep.subr.mxu0 0.0
    %2031 = vmatpush2.msra.mxu0 0.0
    %2032 = vmatprep.subr.mxu0 0.0
    %2033 = vmatpush2.msra.mxu0 0.0
    %2034 = vmatprep.mubr.f32.mxu0 0.0
    %2035 = vmatmul.mubr.f32.gmra.mxu0 %v1944
    %v2036 = vpop.f32.mrf.mxu0
    %v2037 = vadd.f32 %v1969, %v2036
    %v2038 = vpop.f32.mrf.mxu0
    %2039 = vmatprep.mubr.f32.mxu0 0.0
    %2040 = vmatmul.mubr.f32.gmra.mxu0 %v1945
    %v2041 = vpop.f32.mrf.mxu0
    %v2042 = vadd.f32 %v1969, %v2041
    %v2043 = vpop.f32.mrf.mxu0
    %2044 = vmatprep.mubr.f32.mxu0 0.0
    %2045 = vmatmul.mubr.f32.gmra.mxu0 %v1946
    %v2046 = vpop.f32.mrf.mxu0
    %v2047 = vadd.f32 %v1969, %v2046
    %v2048 = vpop.f32.mrf.mxu0
    %2049 = vmatprep.mubr.f32.mxu0 0.0
    %2050 = vmatmul.mubr.f32.gmra.mxu0 %v1947
    %v2051 = vpop.f32.mrf.mxu0
    %v2052 = vadd.f32 %v1969, %v2051
    %v2053 = vpop.f32.mrf.mxu0
    %2054 = vmatprep.mubr.f32.mxu0 0.0
    %2055 = vmatmul.mubr.f32.gmra.mxu0 %v1948
    %v2056 = vpop.f32.mrf.mxu0
    %v2057 = vadd.f32 %v1969, %v2056
    %v2058 = vpop.f32.mrf.mxu0
    %2059 = vmatprep.mubr.f32.mxu0 0.0
    %2060 = vmatmul.mubr.f32.gmra.mxu0 %v1949
    %v2061 = vpop.f32.mrf.mxu0
    %v2062 = vadd.f32 %v1969, %v2061
    %v2063 = vpop.f32.mrf.mxu0
    %2064 = vmatprep.mubr.f32.mxu0 0.0
    %2065 = vmatmul.mubr.f32.gmra.mxu0 %v1950
    %v2066 = vpop.f32.mrf.mxu0
    %v2067 = vadd.f32 %v1969, %v2066
    %v2068 = vpop.f32.mrf.mxu0
    %2069 = vmatprep.mubr.f32.mxu0 0.0
    %2070 = vmatmul.mubr.f32.gmra.mxu0 %v1951
    %v2071 = vpop.f32.mrf.mxu0
    %v2072 = vadd.f32 %v1969, %v2071
    %v2073 = vpop.f32.mrf.mxu0
    %2074 = vdwg.mxu0
    %2075 = vst [vmem:[#allocation11] sm:$0xff] %v2037
    %2076 = vst [vmem:[#allocation11 + $0x8] sm:$0xff] %v2042
    %2077 = vst [vmem:[#allocation11 + $0x10] sm:$0xff] %v2047
    %2078 = vst [vmem:[#allocation11 + $0x18] sm:$0xff] %v2052
    %2079 = vst [vmem:[#allocation11 + $0x20] sm:$0xff] %v2057
    %2080 = vst [vmem:[#allocation11 + $0x28] sm:$0xff] %v2062
    %2081 = vst [vmem:[#allocation11 + $0x30] sm:$0xff] %v2067
    %2082 = vst [vmem:[#allocation11 + $0x38] sm:$0xff] %v2072
    %2083 = vst [vmem:[#allocation12] sm:$0xff] %v1942
    %2084 = vst [vmem:[#allocation14] sm:$0xff] %v1940
    // Predicated region
    $region46: #{tpu_custom_call.1} parent=1 // pred_check
      _
    $region47: #{tpu_custom_call.1} parent=1 // pred_check_branch
      %2086 = sbr.rel (0) target = $region49
    $region48: #{tpu_custom_call.1} parent=1 // pred_region
      %s2088 = ssub.s32 1024, 1024
      %2089 = vsyncadd [#allocation7], %s2088
      %s2090 = sshll.u32 [#allocation11], 4
      %s2091 = int_to_ptr.vmem [resolvable:$true] %s2090
      %2096 = dma.vmem_to_hbm [thread:$0]  %s2091, 1024, %s8, [#allocation7], 128, 128, 8
    $region49: #{tpu_custom_call.1} parent=1 // pred_fallthru
      _
    // Predicated region
    $region50: #{tpu_custom_call.1} parent=1 // pred_check
      _
    $region51: #{tpu_custom_call.1} parent=1 // pred_check_branch
      %2098 = sbr.rel (0) target = $region53
    $region52: #{tpu_custom_call.1} parent=1 // pred_region
      %s2100 = ssub.s32 128, 128
      %2101 = vsyncadd [#allocation13], %s2100
      %s2103 = sshll.u32 [#allocation12], 4
      %s2104 = int_to_ptr.vmem [resolvable:$true] %s2103
      %2106 = dma.vmem_to_hbm [thread:$0]  %s2104, 128, %s9, [#allocation13]
    $region53: #{tpu_custom_call.1} parent=1 // pred_fallthru
      _
    // Predicated region
    $region54: #{tpu_custom_call.1} parent=1 // pred_check
      _
    $region55: #{tpu_custom_call.1} parent=1 // pred_check_branch
      %2108 = sbr.rel (0) target = $region57
    $region56: #{tpu_custom_call.1} parent=1 // pred_region
      %s2110 = ssub.s32 128, 128
      %2111 = vsyncadd [#allocation13], %s2110
      %s2113 = sshll.u32 [#allocation14], 4
      %s2114 = int_to_ptr.vmem [resolvable:$true] %s2113
      %2116 = dma.vmem_to_hbm [thread:$0]  %s2114, 128, %s10, [#allocation13]
    $region57: #{tpu_custom_call.1} parent=1 // pred_fallthru
      _
    // Predicated region
    $region58: #{tpu_custom_call.1} parent=1 // pred_check
      _
    $region59: #{tpu_custom_call.1} parent=1 // pred_check_branch
      %2118 = sbr.rel (0) target = $region61
    $region60: #{tpu_custom_call.1} parent=1 // pred_region
      %2119 = dma.done [#allocation7], 1024
    $region61: #{tpu_custom_call.1} parent=1 // pred_fallthru
      _
    // Predicated region
    $region62: #{tpu_custom_call.1} parent=1 // pred_check
      _
    $region63: #{tpu_custom_call.1} parent=1 // pred_check_branch
      %2121 = sbr.rel (0) target = $region65
    $region64: #{tpu_custom_call.1} parent=1 // pred_region
      %2122 = dma.done [#allocation13], 128
    $region65: #{tpu_custom_call.1} parent=1 // pred_fallthru
      _
    // Predicated region
    $region66: #{tpu_custom_call.1} parent=1 // pred_check
      _
    $region67: #{tpu_custom_call.1} parent=1 // pred_check_branch
      %2124 = sbr.rel (0) target = $region69
    $region68: #{tpu_custom_call.1} parent=1 // pred_region
      %2125 = dma.done [#allocation13], 128
    $region69: #{tpu_custom_call.1} parent=1 // pred_fallthru
      _
    %2126 = vsyncpa [#allocation6], 1
    %2127 = vsyncpa [#allocation9], 1
    %2128 = vsyncpa [#allocation7], 1
    %2129 = vsyncpa [#allocation13], 1

</llo_original>
